<compile_context>
chip_gen: v6e
topology: v6e:2x2x1
jax: 0.10.0
libtpu: 0.0.40
codegen_flags: <defaults>
</compile_context>

<pallas_src>
import functools

import jax
import jax.numpy as jnp
from jax.experimental import pallas as pl
from jax.experimental.pallas import tpu as pltpu

LANES = 128  # TPU lane width; fused output slab is padded to this.


def rnn_seq_kernel(x_ref, h0_ref, wx_ref, wh_ref, b_ref, lmask_ref,
                   out_ref, h_ref, *, TU):
    """One grid step == TU unrolled RNN time steps.

    h_ref is the (constant-index-map) output block used as the VMEM-resident
    running hidden state; it is only written back to HBM when the grid ends.
    """
    blk = pl.program_id(0)

    @pl.when(blk == 0)
    def _():
        h_ref[...] = h0_ref[...]

    wx = wx_ref[...]          # (I, P)  bf16, resident in VMEM
    wh = wh_ref[...]          # (P, P)  bf16, resident (rows >= H are zero)
    b = b_ref[...]            # (1, P)  f32,  resident
    lmask = lmask_ref[...]    # (1, P)  f32: 0 on logit lanes, -1e30 elsewhere

    # Static unroll over TU time steps.
    for u in range(TU):
        x = x_ref[u]                                    # (B, I) bf16
        h = h_ref[...].astype(wh.dtype)                 # (B, P) f32 -> bf16
        y = (jnp.dot(x, wx, preferred_element_type=jnp.float32)
             + jnp.dot(h, wh, preferred_element_type=jnp.float32)
             + b)                                       # (B, P) f32

        # Recurrent state update.  Lanes >= H carry stale logits / zeros but
        # the corresponding Wh rows are zero, so no masking is needed here.
        h_ref[...] = y

        # Off the recurrence chain: masked, numerically stable log-softmax
        # over the logit lanes only (precomputed additive mask, no iota).
        z = y + lmask
        m = jnp.max(z, axis=1, keepdims=True)
        s = jnp.sum(jnp.exp(z - m), axis=1, keepdims=True)
        out_ref[u] = y - (m + jnp.log(s))               # lane-dense store


def rnn_forward(xs, h0, w_i2h, b_i2h, w_i2o, b_i2o, *, slice_outputs=True):
    """Run the RNN over a sequence inside a single Pallas kernel.

    xs: (T, B, input_size); h0: (B, hidden_size)
    w_i2h: (input+hidden, hidden)   b_i2h: (hidden,)
    w_i2o: (input+hidden, output)   b_i2o: (output,)
    Returns (outs (T, B, output), h_final (B, hidden)); with
    slice_outputs=False the padded (T, B, 128) / (B, 128) slabs are returned
    so downstream consumers can avoid an extra HBM copy.
    """
    T, B, I = xs.shape
    H = w_i2h.shape[1]
    O = w_i2o.shape[1]
    P = LANES
    assert H + O <= P, "fused hidden+output must fit in one 128-lane slab"

    f32 = jnp.float32
    bf16 = jnp.bfloat16

    # Fused + lane-padded parameters, built ONCE (outside the per-step path).
    # Result columns [0:H) -> new hidden, [H:H+O) -> logits, rest zero pad.
    wx = jnp.zeros((I, P), f32)
    wx = wx.at[:, :H].set(w_i2h[:I].astype(f32))
    wx = wx.at[:, H:H + O].set(w_i2o[:I].astype(f32))
    wh = jnp.zeros((P, P), f32)
    wh = wh.at[:H, :H].set(w_i2h[I:].astype(f32))
    wh = wh.at[:H, H:H + O].set(w_i2o[I:].astype(f32))
    b = jnp.zeros((1, P), f32)
    b = b.at[0, :H].set(b_i2h.astype(f32))
    b = b.at[0, H:H + O].set(b_i2o.astype(f32))
    lane = jnp.arange(P)
    lmask = jnp.where((lane >= H) & (lane < H + O), 0.0, -1e30)
    lmask = lmask.astype(f32)[None, :]
    h0p = jnp.zeros((B, P), f32).at[:, :H].set(h0.astype(f32))

    # Time-unroll factor: largest of (8, 4, 2, 1) dividing T.
    TU = next(u for u in (8, 4, 2, 1) if T % u == 0)

    kernel = functools.partial(rnn_seq_kernel, TU=TU)
    out_pad, h_pad = pl.pallas_call(
        kernel,
        out_shape=(jax.ShapeDtypeStruct((T, B, P), f32),
                   jax.ShapeDtypeStruct((B, P), f32)),
        grid_spec=pltpu.PrefetchScalarGridSpec(
            num_scalar_prefetch=0,
            grid=(T // TU,),
            in_specs=[
                pl.BlockSpec((TU, B, I), lambda t: (t, 0, 0)),  # x chunk, pipelined
                pl.BlockSpec((B, P), lambda t: (0, 0)),         # h0 (fetched once)
                pl.BlockSpec((I, P), lambda t: (0, 0)),         # Wx (resident)
                pl.BlockSpec((P, P), lambda t: (0, 0)),         # Wh (resident)
                pl.BlockSpec((1, P), lambda t: (0, 0)),         # bias (resident)
                pl.BlockSpec((1, P), lambda t: (0, 0)),         # logit mask (resident)
            ],
            out_specs=[
                pl.BlockSpec((TU, B, P), lambda t: (t, 0, 0)),  # out chunk, lane-dense
                pl.BlockSpec((B, P), lambda t: (0, 0)),         # running/final hidden
            ],
        ),
        compiler_params=pltpu.CompilerParams(
            dimension_semantics=("arbitrary",),                 # recurrence over time
            vmem_limit_bytes=32 * 1024 * 1024,
        ),
    )(xs.astype(bf16), h0p, wx.astype(bf16), wh.astype(bf16), b, lmask)

    if slice_outputs:
        return out_pad[:, :, H:H + O], h_pad[:, :H]
    return out_pad, h_pad


def rnn_step(x, h, w_i2h, b_i2h, w_i2o, b_i2o):
    """Single-step convenience matching the module's forward(x, h) exactly."""
    outs, h_new = rnn_forward(x[None], h, w_i2h, b_i2h, w_i2o, b_i2o)
    return outs[0], h_new


def init_params(key, input_size, hidden_size, output_size):
    """Deterministic init matching nn.Linear shapes (stored transposed (in,out))."""
    fan_in = input_size + hidden_size
    bound = 1.0 / jnp.sqrt(fan_in)
    k1, k2, k3, k4 = jax.random.split(key, 4)
    w_i2h = jax.random.uniform(k1, (fan_in, hidden_size), jnp.float32, -bound, bound)
    b_i2h = jax.random.uniform(k2, (hidden_size,), jnp.float32, -bound, bound)
    w_i2o = jax.random.uniform(k3, (fan_in, output_size), jnp.float32, -bound, bound)
    b_i2o = jax.random.uniform(k4, (output_size,), jnp.float32, -bound, bound)
    return w_i2h, b_i2h, w_i2o, b_i2o


if __name__ == "__main__":
    input_size, hidden_size, output_size = 32, 32, 16
    batch, seq_len = 8, 8

    key = jax.random.PRNGKey(0)
    kx, kp = jax.random.split(key)
    xs = jax.random.normal(kx, (seq_len, batch, input_size), jnp.float32)
    h0 = jnp.zeros((batch, hidden_size), jnp.float32)  # init_hidden() semantics
    w_i2h, b_i2h, w_i2o, b_i2o = init_params(kp, input_size, hidden_size,
                                             output_size)

    outs, h_final = rnn_forward(xs, h0, w_i2h, b_i2h, w_i2o, b_i2o)
    jax.block_until_ready((outs, h_final))

    # Dtype-matched pure-JAX reference: same per-step math as the module, with
    # the kernel's bf16 rounding of weights / matmul operands mirrored so the
    # check stays tight (vs a pure-f32 reference, differences are bounded by
    # bf16 weight quantization).
    f32, bf16 = jnp.float32, jnp.bfloat16
    wr_i2h = w_i2h.astype(bf16).astype(f32)
    wr_i2o = w_i2o.astype(bf16).astype(f32)
    xr = xs.astype(bf16).astype(f32)
    h = h0
    ref_outs = []
    for t in range(seq_len):
        hr = h.astype(bf16).astype(f32)
        comb = jnp.concatenate([xr[t], hr], axis=1)
        h = comb @ wr_i2h + b_i2h
        logits = comb @ wr_i2o + b_i2o
        ref_outs.append(jax.nn.log_softmax(logits, axis=1))
    ref_outs = jnp.stack(ref_outs)

    assert outs.shape == (seq_len, batch, output_size)
    assert h_final.shape == (batch, hidden_size)
    assert jnp.allclose(outs, ref_outs, atol=1e-3, rtol=1e-3), "output mismatch"
    assert jnp.allclose(h_final, h, atol=1e-3, rtol=1e-3), "hidden mismatch"

    print("KERNEL_OK")
</pallas_src>

<mosaic_0001>
module attributes {stable_mosaic.version = 11 : i64} {
  func.func @rnn_seq_kernel(%arg0: i32, %arg1: memref<8x8x32xbf16, #tpu.memory_space<vmem>>, %arg2: memref<8x128xf32, #tpu.memory_space<vmem>>, %arg3: memref<32x128xbf16, #tpu.memory_space<vmem>>, %arg4: memref<128x128xbf16, #tpu.memory_space<vmem>>, %arg5: memref<1x128xf32, #tpu.memory_space<vmem>>, %arg6: memref<1x128xf32, #tpu.memory_space<vmem>>, %arg7: memref<8x8x128xf32, #tpu.memory_space<vmem>>, %arg8: memref<8x128xf32, #tpu.memory_space<vmem>>) attributes {dimension_semantics = [#tpu.dimension_semantics<arbitrary>], iteration_bounds = array<i64: 1>, scalar_prefetch = 0 : i64, scratch_operands = 0 : i64, tpu.core_type = #tpu.core_type<tc>, window_params = [{transform_indices = @transform_0, window_bounds = array<i64: 8, 8, 32>}, {pipeline_mode = #tpu.pipeline_mode<synchronous>, transform_indices = @transform_1, window_bounds = array<i64: 8, 128>}, {pipeline_mode = #tpu.pipeline_mode<synchronous>, transform_indices = @transform_2, window_bounds = array<i64: 32, 128>}, {pipeline_mode = #tpu.pipeline_mode<synchronous>, transform_indices = @transform_3, window_bounds = array<i64: 128, 128>}, {pipeline_mode = #tpu.pipeline_mode<synchronous>, transform_indices = @transform_4, window_bounds = array<i64: 1, 128>}, {pipeline_mode = #tpu.pipeline_mode<synchronous>, transform_indices = @transform_5, window_bounds = array<i64: 1, 128>}, {transform_indices = @transform_6, window_bounds = array<i64: 8, 8, 128>}, {pipeline_mode = #tpu.pipeline_mode<synchronous>, transform_indices = @transform_7, window_bounds = array<i64: 8, 128>}]} {
    %c0_i32 = arith.constant 0 : i32
    %0 = arith.cmpi eq, %arg0, %c0_i32 : i32
    %1 = arith.extui %0 : i1 to i32
    %c0_i32_0 = arith.constant 0 : i32
    %2 = arith.cmpi ne, %1, %c0_i32_0 : i32
    scf.if %2 {
      %c0_112 = arith.constant 0 : index
      %c0_113 = arith.constant 0 : index
      %215 = vector.load %arg2[%c0_112, %c0_113] : memref<8x128xf32, #tpu.memory_space<vmem>>, vector<8x128xf32>
      %c0_114 = arith.constant 0 : index
      %c0_115 = arith.constant 0 : index
      %216 = vector.load %arg8[%c0_114, %c0_115] : memref<8x128xf32, #tpu.memory_space<vmem>>, vector<8x128xf32>
      tpu.vector_store %arg8[%c0_114, %c0_115], %215 {strides = array<i32>} : memref<8x128xf32, #tpu.memory_space<vmem>>, vector<8x128xf32>,
    } else {
    }
    %c0 = arith.constant 0 : index
    %c0_1 = arith.constant 0 : index
    %3 = vector.load %arg3[%c0, %c0_1] : memref<32x128xbf16, #tpu.memory_space<vmem>>, vector<32x128xbf16>
    %c0_2 = arith.constant 0 : index
    %c0_3 = arith.constant 0 : index
    %4 = vector.load %arg4[%c0_2, %c0_3] : memref<128x128xbf16, #tpu.memory_space<vmem>>, vector<128x128xbf16>
    %c0_4 = arith.constant 0 : index
    %c0_5 = arith.constant 0 : index
    %5 = vector.load %arg5[%c0_4, %c0_5] : memref<1x128xf32, #tpu.memory_space<vmem>>, vector<1x128xf32>
    %c0_6 = arith.constant 0 : index
    %c0_7 = arith.constant 0 : index
    %6 = vector.load %arg6[%c0_6, %c0_7] : memref<1x128xf32, #tpu.memory_space<vmem>>, vector<1x128xf32>
    %c0_8 = arith.constant 0 : index
    %c0_9 = arith.constant 0 : index
    %c0_10 = arith.constant 0 : index
    %7 = vector.load %arg1[%c0_8, %c0_9, %c0_10] : memref<8x8x32xbf16, #tpu.memory_space<vmem>>, vector<1x8x32xbf16>
    %8 = vector.shape_cast %7 : vector<1x8x32xbf16> to vector<8x32xbf16>
    %c0_11 = arith.constant 0 : index
    %c0_12 = arith.constant 0 : index
    %9 = vector.load %arg8[%c0_11, %c0_12] : memref<8x128xf32, #tpu.memory_space<vmem>>, vector<8x128xf32>
    %10 = arith.truncf %9 : vector<8x128xf32> to vector<8x128xbf16>
    %cst = arith.constant dense<0.000000e+00> : vector<8x128xf32>
    %11 = tpu.matmul %8, %3, %cst {dimension_numbers = #tpu.dot_dimension_numbers<[1], [0], [0], [1], [0, 0, 1, 1], [], []>} : vector<8x32xbf16>, vector<32x128xbf16>, vector<8x128xf32> -> vector<8x128xf32>
    %cst_13 = arith.constant dense<0.000000e+00> : vector<8x128xf32>
    %12 = tpu.matmul %10, %4, %cst_13 {dimension_numbers = #tpu.dot_dimension_numbers<[1], [0], [0], [1], [0, 0, 1, 1], [], []>} : vector<8x128xbf16>, vector<128x128xbf16>, vector<8x128xf32> -> vector<8x128xf32>
    %13 = arith.addf %11, %12 : vector<8x128xf32>
    %14 = vector.broadcast %5 : vector<1x128xf32> to vector<8x128xf32>
    %15 = arith.addf %13, %14 : vector<8x128xf32>
    %c0_14 = arith.constant 0 : index
    %c0_15 = arith.constant 0 : index
    %16 = vector.load %arg8[%c0_14, %c0_15] : memref<8x128xf32, #tpu.memory_space<vmem>>, vector<8x128xf32>
    tpu.vector_store %arg8[%c0_14, %c0_15], %15 {strides = array<i32>} : memref<8x128xf32, #tpu.memory_space<vmem>>, vector<8x128xf32>,
    %17 = vector.broadcast %6 : vector<1x128xf32> to vector<8x128xf32>
    %18 = arith.addf %15, %17 : vector<8x128xf32>
    %cst_16 = arith.constant dense<0xFF800000> : vector<8xf32>
    %19 = vector.multi_reduction <maximumf>, %18, %cst_16 [1] : vector<8x128xf32> to vector<8xf32>
    %20 = vector.shape_cast %19 : vector<8xf32> to vector<8x1xf32>
    %21 = vector.broadcast %20 : vector<8x1xf32> to vector<8x128xf32>
    %22 = arith.subf %18, %21 : vector<8x128xf32>
    %23 = math.exp %22 : vector<8x128xf32>
    %cst_17 = arith.constant dense<0.000000e+00> : vector<8xf32>
    %24 = vector.multi_reduction <add>, %23, %cst_17 [1] : vector<8x128xf32> to vector<8xf32>
    %25 = vector.shape_cast %24 : vector<8xf32> to vector<8x1xf32>
    %26 = math.log %25 : vector<8x1xf32>
    %27 = arith.addf %20, %26 : vector<8x1xf32>
    %28 = vector.broadcast %27 : vector<8x1xf32> to vector<8x128xf32>
    %29 = arith.subf %15, %28 : vector<8x128xf32>
    %c0_18 = arith.constant 0 : index
    %c0_19 = arith.constant 0 : index
    %c0_20 = arith.constant 0 : index
    %30 = vector.load %arg7[%c0_18, %c0_19, %c0_20] : memref<8x8x128xf32, #tpu.memory_space<vmem>>, vector<1x8x128xf32>
    %31 = vector.shape_cast %30 : vector<1x8x128xf32> to vector<8x128xf32>
    %32 = vector.shape_cast %29 : vector<8x128xf32> to vector<1x8x128xf32>
    tpu.vector_store %arg7[%c0_18, %c0_19, %c0_20], %32 {strides = array<i32>} : memref<8x8x128xf32, #tpu.memory_space<vmem>>, vector<1x8x128xf32>,
    %c1 = arith.constant 1 : index
    %c0_21 = arith.constant 0 : index
    %c0_22 = arith.constant 0 : index
    %33 = vector.load %arg1[%c1, %c0_21, %c0_22] : memref<8x8x32xbf16, #tpu.memory_space<vmem>>, vector<1x8x32xbf16>
    %34 = vector.shape_cast %33 : vector<1x8x32xbf16> to vector<8x32xbf16>
    %c0_23 = arith.constant 0 : index
    %c0_24 = arith.constant 0 : index
    %35 = vector.load %arg8[%c0_23, %c0_24] : memref<8x128xf32, #tpu.memory_space<vmem>>, vector<8x128xf32>
    %36 = arith.truncf %35 : vector<8x128xf32> to vector<8x128xbf16>
    %cst_25 = arith.constant dense<0.000000e+00> : vector<8x128xf32>
    %37 = tpu.matmul %34, %3, %cst_25 {dimension_numbers = #tpu.dot_dimension_numbers<[1], [0], [0], [1], [0, 0, 1, 1], [], []>} : vector<8x32xbf16>, vector<32x128xbf16>, vector<8x128xf32> -> vector<8x128xf32>
    %cst_26 = arith.constant dense<0.000000e+00> : vector<8x128xf32>
    %38 = tpu.matmul %36, %4, %cst_26 {dimension_numbers = #tpu.dot_dimension_numbers<[1], [0], [0], [1], [0, 0, 1, 1], [], []>} : vector<8x128xbf16>, vector<128x128xbf16>, vector<8x128xf32> -> vector<8x128xf32>
    %39 = arith.addf %37, %38 : vector<8x128xf32>
    %40 = vector.broadcast %5 : vector<1x128xf32> to vector<8x128xf32>
    %41 = arith.addf %39, %40 : vector<8x128xf32>
    %c0_27 = arith.constant 0 : index
    %c0_28 = arith.constant 0 : index
    %42 = vector.load %arg8[%c0_27, %c0_28] : memref<8x128xf32, #tpu.memory_space<vmem>>, vector<8x128xf32>
    tpu.vector_store %arg8[%c0_27, %c0_28], %41 {strides = array<i32>} : memref<8x128xf32, #tpu.memory_space<vmem>>, vector<8x128xf32>,
    %43 = vector.broadcast %6 : vector<1x128xf32> to vector<8x128xf32>
    %44 = arith.addf %41, %43 : vector<8x128xf32>
    %cst_29 = arith.constant dense<0xFF800000> : vector<8xf32>
    %45 = vector.multi_reduction <maximumf>, %44, %cst_29 [1] : vector<8x128xf32> to vector<8xf32>
    %46 = vector.shape_cast %45 : vector<8xf32> to vector<8x1xf32>
    %47 = vector.broadcast %46 : vector<8x1xf32> to vector<8x128xf32>
    %48 = arith.subf %44, %47 : vector<8x128xf32>
    %49 = math.exp %48 : vector<8x128xf32>
    %cst_30 = arith.constant dense<0.000000e+00> : vector<8xf32>
    %50 = vector.multi_reduction <add>, %49, %cst_30 [1] : vector<8x128xf32> to vector<8xf32>
    %51 = vector.shape_cast %50 : vector<8xf32> to vector<8x1xf32>
    %52 = math.log %51 : vector<8x1xf32>
    %53 = arith.addf %46, %52 : vector<8x1xf32>
    %54 = vector.broadcast %53 : vector<8x1xf32> to vector<8x128xf32>
    %55 = arith.subf %41, %54 : vector<8x128xf32>
    %c1_31 = arith.constant 1 : index
    %c0_32 = arith.constant 0 : index
    %c0_33 = arith.constant 0 : index
    %56 = vector.load %arg7[%c1_31, %c0_32, %c0_33] : memref<8x8x128xf32, #tpu.memory_space<vmem>>, vector<1x8x128xf32>
    %57 = vector.shape_cast %56 : vector<1x8x128xf32> to vector<8x128xf32>
    %58 = vector.shape_cast %55 : vector<8x128xf32> to vector<1x8x128xf32>
    tpu.vector_store %arg7[%c1_31, %c0_32, %c0_33], %58 {strides = array<i32>} : memref<8x8x128xf32, #tpu.memory_space<vmem>>, vector<1x8x128xf32>,
    %c2 = arith.constant 2 : index
    %c0_34 = arith.constant 0 : index
    %c0_35 = arith.constant 0 : index
    %59 = vector.load %arg1[%c2, %c0_34, %c0_35] : memref<8x8x32xbf16, #tpu.memory_space<vmem>>, vector<1x8x32xbf16>
    %60 = vector.shape_cast %59 : vector<1x8x32xbf16> to vector<8x32xbf16>
    %c0_36 = arith.constant 0 : index
    %c0_37 = arith.constant 0 : index
    %61 = vector.load %arg8[%c0_36, %c0_37] : memref<8x128xf32, #tpu.memory_space<vmem>>, vector<8x128xf32>
    %62 = arith.truncf %61 : vector<8x128xf32> to vector<8x128xbf16>
    %cst_38 = arith.constant dense<0.000000e+00> : vector<8x128xf32>
    %63 = tpu.matmul %60, %3, %cst_38 {dimension_numbers = #tpu.dot_dimension_numbers<[1], [0], [0], [1], [0, 0, 1, 1], [], []>} : vector<8x32xbf16>, vector<32x128xbf16>, vector<8x128xf32> -> vector<8x128xf32>
    %cst_39 = arith.constant dense<0.000000e+00> : vector<8x128xf32>
    %64 = tpu.matmul %62, %4, %cst_39 {dimension_numbers = #tpu.dot_dimension_numbers<[1], [0], [0], [1], [0, 0, 1, 1], [], []>} : vector<8x128xbf16>, vector<128x128xbf16>, vector<8x128xf32> -> vector<8x128xf32>
    %65 = arith.addf %63, %64 : vector<8x128xf32>
    %66 = vector.broadcast %5 : vector<1x128xf32> to vector<8x128xf32>
    %67 = arith.addf %65, %66 : vector<8x128xf32>
    %c0_40 = arith.constant 0 : index
    %c0_41 = arith.constant 0 : index
    %68 = vector.load %arg8[%c0_40, %c0_41] : memref<8x128xf32, #tpu.memory_space<vmem>>, vector<8x128xf32>
    tpu.vector_store %arg8[%c0_40, %c0_41], %67 {strides = array<i32>} : memref<8x128xf32, #tpu.memory_space<vmem>>, vector<8x128xf32>,
    %69 = vector.broadcast %6 : vector<1x128xf32> to vector<8x128xf32>
    %70 = arith.addf %67, %69 : vector<8x128xf32>
    %cst_42 = arith.constant dense<0xFF800000> : vector<8xf32>
    %71 = vector.multi_reduction <maximumf>, %70, %cst_42 [1] : vector<8x128xf32> to vector<8xf32>
    %72 = vector.shape_cast %71 : vector<8xf32> to vector<8x1xf32>
    %73 = vector.broadcast %72 : vector<8x1xf32> to vector<8x128xf32>
    %74 = arith.subf %70, %73 : vector<8x128xf32>
    %75 = math.exp %74 : vector<8x128xf32>
    %cst_43 = arith.constant dense<0.000000e+00> : vector<8xf32>
    %76 = vector.multi_reduction <add>, %75, %cst_43 [1] : vector<8x128xf32> to vector<8xf32>
    %77 = vector.shape_cast %76 : vector<8xf32> to vector<8x1xf32>
    %78 = math.log %77 : vector<8x1xf32>
    %79 = arith.addf %72, %78 : vector<8x1xf32>
    %80 = vector.broadcast %79 : vector<8x1xf32> to vector<8x128xf32>
    %81 = arith.subf %67, %80 : vector<8x128xf32>
    %c2_44 = arith.constant 2 : index
    %c0_45 = arith.constant 0 : index
    %c0_46 = arith.constant 0 : index
    %82 = vector.load %arg7[%c2_44, %c0_45, %c0_46] : memref<8x8x128xf32, #tpu.memory_space<vmem>>, vector<1x8x128xf32>
    %83 = vector.shape_cast %82 : vector<1x8x128xf32> to vector<8x128xf32>
    %84 = vector.shape_cast %81 : vector<8x128xf32> to vector<1x8x128xf32>
    tpu.vector_store %arg7[%c2_44, %c0_45, %c0_46], %84 {strides = array<i32>} : memref<8x8x128xf32, #tpu.memory_space<vmem>>, vector<1x8x128xf32>,
    %c3 = arith.constant 3 : index
    %c0_47 = arith.constant 0 : index
    %c0_48 = arith.constant 0 : index
    %85 = vector.load %arg1[%c3, %c0_47, %c0_48] : memref<8x8x32xbf16, #tpu.memory_space<vmem>>, vector<1x8x32xbf16>
    %86 = vector.shape_cast %85 : vector<1x8x32xbf16> to vector<8x32xbf16>
    %c0_49 = arith.constant 0 : index
    %c0_50 = arith.constant 0 : index
    %87 = vector.load %arg8[%c0_49, %c0_50] : memref<8x128xf32, #tpu.memory_space<vmem>>, vector<8x128xf32>
    %88 = arith.truncf %87 : vector<8x128xf32> to vector<8x128xbf16>
    %cst_51 = arith.constant dense<0.000000e+00> : vector<8x128xf32>
    %89 = tpu.matmul %86, %3, %cst_51 {dimension_numbers = #tpu.dot_dimension_numbers<[1], [0], [0], [1], [0, 0, 1, 1], [], []>} : vector<8x32xbf16>, vector<32x128xbf16>, vector<8x128xf32> -> vector<8x128xf32>
    %cst_52 = arith.constant dense<0.000000e+00> : vector<8x128xf32>
    %90 = tpu.matmul %88, %4, %cst_52 {dimension_numbers = #tpu.dot_dimension_numbers<[1], [0], [0], [1], [0, 0, 1, 1], [], []>} : vector<8x128xbf16>, vector<128x128xbf16>, vector<8x128xf32> -> vector<8x128xf32>
    %91 = arith.addf %89, %90 : vector<8x128xf32>
    %92 = vector.broadcast %5 : vector<1x128xf32> to vector<8x128xf32>
    %93 = arith.addf %91, %92 : vector<8x128xf32>
    %c0_53 = arith.constant 0 : index
    %c0_54 = arith.constant 0 : index
    %94 = vector.load %arg8[%c0_53, %c0_54] : memref<8x128xf32, #tpu.memory_space<vmem>>, vector<8x128xf32>
    tpu.vector_store %arg8[%c0_53, %c0_54], %93 {strides = array<i32>} : memref<8x128xf32, #tpu.memory_space<vmem>>, vector<8x128xf32>,
    %95 = vector.broadcast %6 : vector<1x128xf32> to vector<8x128xf32>
    %96 = arith.addf %93, %95 : vector<8x128xf32>
    %cst_55 = arith.constant dense<0xFF800000> : vector<8xf32>
    %97 = vector.multi_reduction <maximumf>, %96, %cst_55 [1] : vector<8x128xf32> to vector<8xf32>
    %98 = vector.shape_cast %97 : vector<8xf32> to vector<8x1xf32>
    %99 = vector.broadcast %98 : vector<8x1xf32> to vector<8x128xf32>
    %100 = arith.subf %96, %99 : vector<8x128xf32>
    %101 = math.exp %100 : vector<8x128xf32>
    %cst_56 = arith.constant dense<0.000000e+00> : vector<8xf32>
    %102 = vector.multi_reduction <add>, %101, %cst_56 [1] : vector<8x128xf32> to vector<8xf32>
    %103 = vector.shape_cast %102 : vector<8xf32> to vector<8x1xf32>
    %104 = math.log %103 : vector<8x1xf32>
    %105 = arith.addf %98, %104 : vector<8x1xf32>
    %106 = vector.broadcast %105 : vector<8x1xf32> to vector<8x128xf32>
    %107 = arith.subf %93, %106 : vector<8x128xf32>
    %c3_57 = arith.constant 3 : index
    %c0_58 = arith.constant 0 : index
    %c0_59 = arith.constant 0 : index
    %108 = vector.load %arg7[%c3_57, %c0_58, %c0_59] : memref<8x8x128xf32, #tpu.memory_space<vmem>>, vector<1x8x128xf32>
    %109 = vector.shape_cast %108 : vector<1x8x128xf32> to vector<8x128xf32>
    %110 = vector.shape_cast %107 : vector<8x128xf32> to vector<1x8x128xf32>
    tpu.vector_store %arg7[%c3_57, %c0_58, %c0_59], %110 {strides = array<i32>} : memref<8x8x128xf32, #tpu.memory_space<vmem>>, vector<1x8x128xf32>,
    %c4 = arith.constant 4 : index
    %c0_60 = arith.constant 0 : index
    %c0_61 = arith.constant 0 : index
    %111 = vector.load %arg1[%c4, %c0_60, %c0_61] : memref<8x8x32xbf16, #tpu.memory_space<vmem>>, vector<1x8x32xbf16>
    %112 = vector.shape_cast %111 : vector<1x8x32xbf16> to vector<8x32xbf16>
    %c0_62 = arith.constant 0 : index
    %c0_63 = arith.constant 0 : index
    %113 = vector.load %arg8[%c0_62, %c0_63] : memref<8x128xf32, #tpu.memory_space<vmem>>, vector<8x128xf32>
    %114 = arith.truncf %113 : vector<8x128xf32> to vector<8x128xbf16>
    %cst_64 = arith.constant dense<0.000000e+00> : vector<8x128xf32>
    %115 = tpu.matmul %112, %3, %cst_64 {dimension_numbers = #tpu.dot_dimension_numbers<[1], [0], [0], [1], [0, 0, 1, 1], [], []>} : vector<8x32xbf16>, vector<32x128xbf16>, vector<8x128xf32> -> vector<8x128xf32>
    %cst_65 = arith.constant dense<0.000000e+00> : vector<8x128xf32>
    %116 = tpu.matmul %114, %4, %cst_65 {dimension_numbers = #tpu.dot_dimension_numbers<[1], [0], [0], [1], [0, 0, 1, 1], [], []>} : vector<8x128xbf16>, vector<128x128xbf16>, vector<8x128xf32> -> vector<8x128xf32>
    %117 = arith.addf %115, %116 : vector<8x128xf32>
    %118 = vector.broadcast %5 : vector<1x128xf32> to vector<8x128xf32>
    %119 = arith.addf %117, %118 : vector<8x128xf32>
    %c0_66 = arith.constant 0 : index
    %c0_67 = arith.constant 0 : index
    %120 = vector.load %arg8[%c0_66, %c0_67] : memref<8x128xf32, #tpu.memory_space<vmem>>, vector<8x128xf32>
    tpu.vector_store %arg8[%c0_66, %c0_67], %119 {strides = array<i32>} : memref<8x128xf32, #tpu.memory_space<vmem>>, vector<8x128xf32>,
    %121 = vector.broadcast %6 : vector<1x128xf32> to vector<8x128xf32>
    %122 = arith.addf %119, %121 : vector<8x128xf32>
    %cst_68 = arith.constant dense<0xFF800000> : vector<8xf32>
    %123 = vector.multi_reduction <maximumf>, %122, %cst_68 [1] : vector<8x128xf32> to vector<8xf32>
    %124 = vector.shape_cast %123 : vector<8xf32> to vector<8x1xf32>
    %125 = vector.broadcast %124 : vector<8x1xf32> to vector<8x128xf32>
    %126 = arith.subf %122, %125 : vector<8x128xf32>
    %127 = math.exp %126 : vector<8x128xf32>
    %cst_69 = arith.constant dense<0.000000e+00> : vector<8xf32>
    %128 = vector.multi_reduction <add>, %127, %cst_69 [1] : vector<8x128xf32> to vector<8xf32>
    %129 = vector.shape_cast %128 : vector<8xf32> to vector<8x1xf32>
    %130 = math.log %129 : vector<8x1xf32>
    %131 = arith.addf %124, %130 : vector<8x1xf32>
    %132 = vector.broadcast %131 : vector<8x1xf32> to vector<8x128xf32>
    %133 = arith.subf %119, %132 : vector<8x128xf32>
    %c4_70 = arith.constant 4 : index
    %c0_71 = arith.constant 0 : index
    %c0_72 = arith.constant 0 : index
    %134 = vector.load %arg7[%c4_70, %c0_71, %c0_72] : memref<8x8x128xf32, #tpu.memory_space<vmem>>, vector<1x8x128xf32>
    %135 = vector.shape_cast %134 : vector<1x8x128xf32> to vector<8x128xf32>
    %136 = vector.shape_cast %133 : vector<8x128xf32> to vector<1x8x128xf32>
    tpu.vector_store %arg7[%c4_70, %c0_71, %c0_72], %136 {strides = array<i32>} : memref<8x8x128xf32, #tpu.memory_space<vmem>>, vector<1x8x128xf32>,
    %c5 = arith.constant 5 : index
    %c0_73 = arith.constant 0 : index
    %c0_74 = arith.constant 0 : index
    %137 = vector.load %arg1[%c5, %c0_73, %c0_74] : memref<8x8x32xbf16, #tpu.memory_space<vmem>>, vector<1x8x32xbf16>
    %138 = vector.shape_cast %137 : vector<1x8x32xbf16> to vector<8x32xbf16>
    %c0_75 = arith.constant 0 : index
    %c0_76 = arith.constant 0 : index
    %139 = vector.load %arg8[%c0_75, %c0_76] : memref<8x128xf32, #tpu.memory_space<vmem>>, vector<8x128xf32>
    %140 = arith.truncf %139 : vector<8x128xf32> to vector<8x128xbf16>
    %cst_77 = arith.constant dense<0.000000e+00> : vector<8x128xf32>
    %141 = tpu.matmul %138, %3, %cst_77 {dimension_numbers = #tpu.dot_dimension_numbers<[1], [0], [0], [1], [0, 0, 1, 1], [], []>} : vector<8x32xbf16>, vector<32x128xbf16>, vector<8x128xf32> -> vector<8x128xf32>
    %cst_78 = arith.constant dense<0.000000e+00> : vector<8x128xf32>
    %142 = tpu.matmul %140, %4, %cst_78 {dimension_numbers = #tpu.dot_dimension_numbers<[1], [0], [0], [1], [0, 0, 1, 1], [], []>} : vector<8x128xbf16>, vector<128x128xbf16>, vector<8x128xf32> -> vector<8x128xf32>
    %143 = arith.addf %141, %142 : vector<8x128xf32>
    %144 = vector.broadcast %5 : vector<1x128xf32> to vector<8x128xf32>
    %145 = arith.addf %143, %144 : vector<8x128xf32>
    %c0_79 = arith.constant 0 : index
    %c0_80 = arith.constant 0 : index
    %146 = vector.load %arg8[%c0_79, %c0_80] : memref<8x128xf32, #tpu.memory_space<vmem>>, vector<8x128xf32>
    tpu.vector_store %arg8[%c0_79, %c0_80], %145 {strides = array<i32>} : memref<8x128xf32, #tpu.memory_space<vmem>>, vector<8x128xf32>,
    %147 = vector.broadcast %6 : vector<1x128xf32> to vector<8x128xf32>
    %148 = arith.addf %145, %147 : vector<8x128xf32>
    %cst_81 = arith.constant dense<0xFF800000> : vector<8xf32>
    %149 = vector.multi_reduction <maximumf>, %148, %cst_81 [1] : vector<8x128xf32> to vector<8xf32>
    %150 = vector.shape_cast %149 : vector<8xf32> to vector<8x1xf32>
    %151 = vector.broadcast %150 : vector<8x1xf32> to vector<8x128xf32>
    %152 = arith.subf %148, %151 : vector<8x128xf32>
    %153 = math.exp %152 : vector<8x128xf32>
    %cst_82 = arith.constant dense<0.000000e+00> : vector<8xf32>
    %154 = vector.multi_reduction <add>, %153, %cst_82 [1] : vector<8x128xf32> to vector<8xf32>
    %155 = vector.shape_cast %154 : vector<8xf32> to vector<8x1xf32>
    %156 = math.log %155 : vector<8x1xf32>
    %157 = arith.addf %150, %156 : vector<8x1xf32>
    %158 = vector.broadcast %157 : vector<8x1xf32> to vector<8x128xf32>
    %159 = arith.subf %145, %158 : vector<8x128xf32>
    %c5_83 = arith.constant 5 : index
    %c0_84 = arith.constant 0 : index
    %c0_85 = arith.constant 0 : index
    %160 = vector.load %arg7[%c5_83, %c0_84, %c0_85] : memref<8x8x128xf32, #tpu.memory_space<vmem>>, vector<1x8x128xf32>
    %161 = vector.shape_cast %160 : vector<1x8x128xf32> to vector<8x128xf32>
    %162 = vector.shape_cast %159 : vector<8x128xf32> to vector<1x8x128xf32>
    tpu.vector_store %arg7[%c5_83, %c0_84, %c0_85], %162 {strides = array<i32>} : memref<8x8x128xf32, #tpu.memory_space<vmem>>, vector<1x8x128xf32>,
    %c6 = arith.constant 6 : index
    %c0_86 = arith.constant 0 : index
    %c0_87 = arith.constant 0 : index
    %163 = vector.load %arg1[%c6, %c0_86, %c0_87] : memref<8x8x32xbf16, #tpu.memory_space<vmem>>, vector<1x8x32xbf16>
    %164 = vector.shape_cast %163 : vector<1x8x32xbf16> to vector<8x32xbf16>
    %c0_88 = arith.constant 0 : index
    %c0_89 = arith.constant 0 : index
    %165 = vector.load %arg8[%c0_88, %c0_89] : memref<8x128xf32, #tpu.memory_space<vmem>>, vector<8x128xf32>
    %166 = arith.truncf %165 : vector<8x128xf32> to vector<8x128xbf16>
    %cst_90 = arith.constant dense<0.000000e+00> : vector<8x128xf32>
    %167 = tpu.matmul %164, %3, %cst_90 {dimension_numbers = #tpu.dot_dimension_numbers<[1], [0], [0], [1], [0, 0, 1, 1], [], []>} : vector<8x32xbf16>, vector<32x128xbf16>, vector<8x128xf32> -> vector<8x128xf32>
    %cst_91 = arith.constant dense<0.000000e+00> : vector<8x128xf32>
    %168 = tpu.matmul %166, %4, %cst_91 {dimension_numbers = #tpu.dot_dimension_numbers<[1], [0], [0], [1], [0, 0, 1, 1], [], []>} : vector<8x128xbf16>, vector<128x128xbf16>, vector<8x128xf32> -> vector<8x128xf32>
    %169 = arith.addf %167, %168 : vector<8x128xf32>
    %170 = vector.broadcast %5 : vector<1x128xf32> to vector<8x128xf32>
    %171 = arith.addf %169, %170 : vector<8x128xf32>
    %c0_92 = arith.constant 0 : index
    %c0_93 = arith.constant 0 : index
    %172 = vector.load %arg8[%c0_92, %c0_93] : memref<8x128xf32, #tpu.memory_space<vmem>>, vector<8x128xf32>
    tpu.vector_store %arg8[%c0_92, %c0_93], %171 {strides = array<i32>} : memref<8x128xf32, #tpu.memory_space<vmem>>, vector<8x128xf32>,
    %173 = vector.broadcast %6 : vector<1x128xf32> to vector<8x128xf32>
    %174 = arith.addf %171, %173 : vector<8x128xf32>
    %cst_94 = arith.constant dense<0xFF800000> : vector<8xf32>
    %175 = vector.multi_reduction <maximumf>, %174, %cst_94 [1] : vector<8x128xf32> to vector<8xf32>
    %176 = vector.shape_cast %175 : vector<8xf32> to vector<8x1xf32>
    %177 = vector.broadcast %176 : vector<8x1xf32> to vector<8x128xf32>
    %178 = arith.subf %174, %177 : vector<8x128xf32>
    %179 = math.exp %178 : vector<8x128xf32>
    %cst_95 = arith.constant dense<0.000000e+00> : vector<8xf32>
    %180 = vector.multi_reduction <add>, %179, %cst_95 [1] : vector<8x128xf32> to vector<8xf32>
    %181 = vector.shape_cast %180 : vector<8xf32> to vector<8x1xf32>
    %182 = math.log %181 : vector<8x1xf32>
    %183 = arith.addf %176, %182 : vector<8x1xf32>
    %184 = vector.broadcast %183 : vector<8x1xf32> to vector<8x128xf32>
    %185 = arith.subf %171, %184 : vector<8x128xf32>
    %c6_96 = arith.constant 6 : index
    %c0_97 = arith.constant 0 : index
    %c0_98 = arith.constant 0 : index
    %186 = vector.load %arg7[%c6_96, %c0_97, %c0_98] : memref<8x8x128xf32, #tpu.memory_space<vmem>>, vector<1x8x128xf32>
    %187 = vector.shape_cast %186 : vector<1x8x128xf32> to vector<8x128xf32>
    %188 = vector.shape_cast %185 : vector<8x128xf32> to vector<1x8x128xf32>
    tpu.vector_store %arg7[%c6_96, %c0_97, %c0_98], %188 {strides = array<i32>} : memref<8x8x128xf32, #tpu.memory_space<vmem>>, vector<1x8x128xf32>,
    %c7 = arith.constant 7 : index
    %c0_99 = arith.constant 0 : index
    %c0_100 = arith.constant 0 : index
    %189 = vector.load %arg1[%c7, %c0_99, %c0_100] : memref<8x8x32xbf16, #tpu.memory_space<vmem>>, vector<1x8x32xbf16>
    %190 = vector.shape_cast %189 : vector<1x8x32xbf16> to vector<8x32xbf16>
    %c0_101 = arith.constant 0 : index
    %c0_102 = arith.constant 0 : index
    %191 = vector.load %arg8[%c0_101, %c0_102] : memref<8x128xf32, #tpu.memory_space<vmem>>, vector<8x128xf32>
    %192 = arith.truncf %191 : vector<8x128xf32> to vector<8x128xbf16>
    %cst_103 = arith.constant dense<0.000000e+00> : vector<8x128xf32>
    %193 = tpu.matmul %190, %3, %cst_103 {dimension_numbers = #tpu.dot_dimension_numbers<[1], [0], [0], [1], [0, 0, 1, 1], [], []>} : vector<8x32xbf16>, vector<32x128xbf16>, vector<8x128xf32> -> vector<8x128xf32>
    %cst_104 = arith.constant dense<0.000000e+00> : vector<8x128xf32>
    %194 = tpu.matmul %192, %4, %cst_104 {dimension_numbers = #tpu.dot_dimension_numbers<[1], [0], [0], [1], [0, 0, 1, 1], [], []>} : vector<8x128xbf16>, vector<128x128xbf16>, vector<8x128xf32> -> vector<8x128xf32>
    %195 = arith.addf %193, %194 : vector<8x128xf32>
    %196 = vector.broadcast %5 : vector<1x128xf32> to vector<8x128xf32>
    %197 = arith.addf %195, %196 : vector<8x128xf32>
    %c0_105 = arith.constant 0 : index
    %c0_106 = arith.constant 0 : index
    %198 = vector.load %arg8[%c0_105, %c0_106] : memref<8x128xf32, #tpu.memory_space<vmem>>, vector<8x128xf32>
    tpu.vector_store %arg8[%c0_105, %c0_106], %197 {strides = array<i32>} : memref<8x128xf32, #tpu.memory_space<vmem>>, vector<8x128xf32>,
    %199 = vector.broadcast %6 : vector<1x128xf32> to vector<8x128xf32>
    %200 = arith.addf %197, %199 : vector<8x128xf32>
    %cst_107 = arith.constant dense<0xFF800000> : vector<8xf32>
    %201 = vector.multi_reduction <maximumf>, %200, %cst_107 [1] : vector<8x128xf32> to vector<8xf32>
    %202 = vector.shape_cast %201 : vector<8xf32> to vector<8x1xf32>
    %203 = vector.broadcast %202 : vector<8x1xf32> to vector<8x128xf32>
    %204 = arith.subf %200, %203 : vector<8x128xf32>
    %205 = math.exp %204 : vector<8x128xf32>
    %cst_108 = arith.constant dense<0.000000e+00> : vector<8xf32>
    %206 = vector.multi_reduction <add>, %205, %cst_108 [1] : vector<8x128xf32> to vector<8xf32>
    %207 = vector.shape_cast %206 : vector<8xf32> to vector<8x1xf32>
    %208 = math.log %207 : vector<8x1xf32>
    %209 = arith.addf %202, %208 : vector<8x1xf32>
    %210 = vector.broadcast %209 : vector<8x1xf32> to vector<8x128xf32>
    %211 = arith.subf %197, %210 : vector<8x128xf32>
    %c7_109 = arith.constant 7 : index
    %c0_110 = arith.constant 0 : index
    %c0_111 = arith.constant 0 : index
    %212 = vector.load %arg7[%c7_109, %c0_110, %c0_111] : memref<8x8x128xf32, #tpu.memory_space<vmem>>, vector<1x8x128xf32>
    %213 = vector.shape_cast %212 : vector<1x8x128xf32> to vector<8x128xf32>
    %214 = vector.shape_cast %211 : vector<8x128xf32> to vector<1x8x128xf32>
    tpu.vector_store %arg7[%c7_109, %c0_110, %c0_111], %214 {strides = array<i32>} : memref<8x8x128xf32, #tpu.memory_space<vmem>>, vector<1x8x128xf32>,
    return
  }
  func.func @transform_0(%arg0: i32) -> (i32, i32, i32) {
    %c0_i32 = arith.constant 0 : i32
    %c0_i32_0 = arith.constant 0 : i32
    %c0_i32_1 = arith.constant 0 : i32
    return %arg0, %c0_i32, %c0_i32_0 : i32, i32, i32
  }
  func.func @transform_1(%arg0: i32) -> (i32, i32) {
    %c0_i32 = arith.constant 0 : i32
    %c0_i32_0 = arith.constant 0 : i32
    %c0_i32_1 = arith.constant 0 : i32
    return %c0_i32, %c0_i32_0 : i32, i32
  }
  func.func @transform_2(%arg0: i32) -> (i32, i32) {
    %c0_i32 = arith.constant 0 : i32
    %c0_i32_0 = arith.constant 0 : i32
    %c0_i32_1 = arith.constant 0 : i32
    return %c0_i32, %c0_i32_0 : i32, i32
  }
  func.func @transform_3(%arg0: i32) -> (i32, i32) {
    %c0_i32 = arith.constant 0 : i32
    %c0_i32_0 = arith.constant 0 : i32
    %c0_i32_1 = arith.constant 0 : i32
    return %c0_i32, %c0_i32_0 : i32, i32
  }
  func.func @transform_4(%arg0: i32) -> (i32, i32) {
    %c0_i32 = arith.constant 0 : i32
    %c0_i32_0 = arith.constant 0 : i32
    %c0_i32_1 = arith.constant 0 : i32
    return %c0_i32, %c0_i32_0 : i32, i32
  }
  func.func @transform_5(%arg0: i32) -> (i32, i32) {
    %c0_i32 = arith.constant 0 : i32
    %c0_i32_0 = arith.constant 0 : i32
    %c0_i32_1 = arith.constant 0 : i32
    return %c0_i32, %c0_i32_0 : i32, i32
  }
  func.func @transform_6(%arg0: i32) -> (i32, i32, i32) {
    %c0_i32 = arith.constant 0 : i32
    %c0_i32_0 = arith.constant 0 : i32
    %c0_i32_1 = arith.constant 0 : i32
    return %arg0, %c0_i32, %c0_i32_0 : i32, i32, i32
  }
  func.func @transform_7(%arg0: i32) -> (i32, i32) {
    %c0_i32 = arith.constant 0 : i32
    %c0_i32_0 = arith.constant 0 : i32
    %c0_i32_1 = arith.constant 0 : i32
    return %c0_i32, %c0_i32_0 : i32, i32
  }
}

</mosaic_0001>

<llo_original>
// kernel: tpu_custom_call.1
$region0: #{tpu_custom_call.1}
  #allocation0 [shape = 'u32[]', space=smem, size = 0x4, offset = 0x4, fixed_abs, tag = 'smem constant byte address 0x4 - core index']
  #allocation1 [shape = 'u32[144,128]{1,0:T(1,128)}', space=vmem, size = 0x12000, scoped, tag = 'internal scratch']
  %s0 = inlined_call_operand.hbm [shape: bf16[8,8,32], index: 0, kind: input, shape index: {}]
  %s1 = inlined_call_operand.hbm [shape: f32[8,128], index: 1, kind: input, shape index: {}]
  %s2 = inlined_call_operand.hbm [shape: bf16[32,128], index: 2, kind: input, shape index: {}]
  %s3 = inlined_call_operand.hbm [shape: bf16[128,128], index: 3, kind: input, shape index: {}]
  %s4 = inlined_call_operand.vmem [shape: f32[1,128], index: 4, kind: input, shape index: {}]
  %s5 = inlined_call_operand.vmem [shape: f32[1,128], index: 5, kind: input, shape index: {}]
  %s6 = inlined_call_operand.hbm [shape: f32[8,8,128], index: 6, kind: output, shape index: {0}]
  %s7 = inlined_call_operand.hbm [shape: f32[8,128], index: 7, kind: output, shape index: {1}]
  %8 = xla_tuple %s6, %s7
  %s9 = sld [smem:[#allocation0]]
  $region62: #{tpu_custom_call.1} parent=0
    _
  %s11 = ssub.s32 1, %s9
  %s12 = scalar_select 0, %s11, %s9
  $region1: #{tpu_custom_call.1} parent=0
    #allocation2 [shape = 'u8[16384]{0}', space=vmem, size = 0x4000, scoped, tag = 'input window, operand 0, single buffered']
    #allocation3 [shape = 's32[1]{0}', space=sflag, size = 0x4, scoped, tag = 'scoped memory for tpu_custom_call.1']
    #allocation4 [shape = 's32[1]{0}', space=sflag, size = 0x4, scoped, tag = 'scoped memory for tpu_custom_call.1']
    #allocation5 [shape = 'u8[4096]{0}', space=vmem, size = 0x1000, scoped, tag = 'input window, operand 1, single buffered']
    #allocation6 [shape = 's32[1]{0}', space=sflag, size = 0x4, scoped, tag = 'scoped memory for tpu_custom_call.1']
    #allocation7 [shape = 'u8[8192]{0}', space=vmem, size = 0x2000, scoped, tag = 'input window, operand 2, single buffered']
    #allocation8 [shape = 'u8[32768]{0}', space=vmem, size = 0x8000, scoped, tag = 'input window, operand 3, single buffered']
    #allocation9 [shape = 's32[1]{0}', space=sflag, size = 0x4, scoped, tag = 'scoped memory for tpu_custom_call.1']
    #allocation10 [shape = 'u8[32768]{0}', space=vmem, size = 0x8000, scoped, tag = 'output window, operand 0, single buffered']
    #allocation11 [shape = 'u8[4096]{0}', space=vmem, size = 0x1000, scoped, tag = 'output window, operand 1, single buffered']
    #allocation12 [shape = 's32[1]{0}', space=sflag, size = 0x4, scoped, tag = 'scoped memory for tpu_custom_call.1']
    %13 = vsyncpa [#allocation3], 0
    %14 = vsyncpa [#allocation6], 0
    %15 = vsyncpa [#allocation9], 0
    %16 = vsyncpa [#allocation4], 0
    %17 = vsyncpa [#allocation12], 0
    // Predicated region
    $region2: #{tpu_custom_call.1} parent=1 // pred_check
      _
    $region3: #{tpu_custom_call.1} parent=1 // pred_check_branch
      %19 = sbr.rel (0) target = $region5
    $region4: #{tpu_custom_call.1} parent=1 // pred_region
      %s21 = ssub.s32 512, 512
      %22 = vsyncadd [#allocation3], %s21
      %s23 = sshll.u32 [#allocation2], 4
      %s24 = int_to_ptr.vmem [resolvable:$true] %s23
      %29 = dma.hbm_to_vmem [thread:$0]  %s0, 512, %s24, [#allocation3], 64, 64, 4
    $region5: #{tpu_custom_call.1} parent=1 // pred_fallthru
      _
    // Predicated region
    $region6: #{tpu_custom_call.1} parent=1 // pred_check
      _
    $region7: #{tpu_custom_call.1} parent=1 // pred_check_branch
      %31 = sbr.rel (0) target = $region9
    $region8: #{tpu_custom_call.1} parent=1 // pred_region
      %s33 = ssub.s32 128, 128
      %34 = vsyncadd [#allocation6], %s33
      %s36 = sshll.u32 [#allocation5], 4
      %s37 = int_to_ptr.vmem [resolvable:$true] %s36
      %39 = dma.hbm_to_vmem [thread:$0]  %s1, 128, %s37, [#allocation6]
    $region9: #{tpu_custom_call.1} parent=1 // pred_fallthru
      _
    // Predicated region
    $region10: #{tpu_custom_call.1} parent=1 // pred_check
      _
    $region11: #{tpu_custom_call.1} parent=1 // pred_check_branch
      %41 = sbr.rel (0) target = $region13
    $region12: #{tpu_custom_call.1} parent=1 // pred_region
      %s43 = ssub.s32 256, 256
      %44 = vsyncadd [#allocation6], %s43
      %s45 = sshll.u32 [#allocation7], 4
      %s46 = int_to_ptr.vmem [resolvable:$true] %s45
      %51 = dma.hbm_to_vmem [thread:$0]  %s2, 256, %s46, [#allocation6], 64, 64, 4
    $region13: #{tpu_custom_call.1} parent=1 // pred_fallthru
      _
    // Predicated region
    $region14: #{tpu_custom_call.1} parent=1 // pred_check
      _
    $region15: #{tpu_custom_call.1} parent=1 // pred_check_branch
      %53 = sbr.rel (0) target = $region17
    $region16: #{tpu_custom_call.1} parent=1 // pred_region
      %s55 = ssub.s32 1024, 1024
      %56 = vsyncadd [#allocation9], %s55
      %s57 = sshll.u32 [#allocation8], 4
      %s58 = int_to_ptr.vmem [resolvable:$true] %s57
      %63 = dma.hbm_to_vmem [thread:$0]  %s3, 1024, %s58, [#allocation9], 64, 64, 4
    $region17: #{tpu_custom_call.1} parent=1 // pred_fallthru
      _
    // Predicated region
    $region18: #{tpu_custom_call.1} parent=1 // pred_check
      _
    $region19: #{tpu_custom_call.1} parent=1 // pred_check_branch
      %65 = sbr.rel (0) target = $region21
    $region20: #{tpu_custom_call.1} parent=1 // pred_region
      _
    $region21: #{tpu_custom_call.1} parent=1 // pred_fallthru
      _
    // Predicated region
    $region22: #{tpu_custom_call.1} parent=1 // pred_check
      _
    $region23: #{tpu_custom_call.1} parent=1 // pred_check_branch
      %67 = sbr.rel (0) target = $region25
    $region24: #{tpu_custom_call.1} parent=1 // pred_region
      _
    $region25: #{tpu_custom_call.1} parent=1 // pred_fallthru
      _
    // Predicated region
    $region26: #{tpu_custom_call.1} parent=1 // pred_check
      _
    $region27: #{tpu_custom_call.1} parent=1 // pred_check_branch
      %69 = sbr.rel (0) target = $region29
    $region28: #{tpu_custom_call.1} parent=1 // pred_region
      %70 = dma.done [#allocation3], 512
    $region29: #{tpu_custom_call.1} parent=1 // pred_fallthru
      _
    // Predicated region
    $region30: #{tpu_custom_call.1} parent=1 // pred_check
      _
    $region31: #{tpu_custom_call.1} parent=1 // pred_check_branch
      %72 = sbr.rel (0) target = $region33
    $region32: #{tpu_custom_call.1} parent=1 // pred_region
      %73 = dma.done [#allocation6], 128
    $region33: #{tpu_custom_call.1} parent=1 // pred_fallthru
      _
    // Predicated region
    $region34: #{tpu_custom_call.1} parent=1 // pred_check
      _
    $region35: #{tpu_custom_call.1} parent=1 // pred_check_branch
      %75 = sbr.rel (0) target = $region37
    $region36: #{tpu_custom_call.1} parent=1 // pred_region
      %76 = dma.done [#allocation6], 256
    $region37: #{tpu_custom_call.1} parent=1 // pred_fallthru
      _
    // Predicated region
    $region38: #{tpu_custom_call.1} parent=1 // pred_check
      _
    $region39: #{tpu_custom_call.1} parent=1 // pred_check_branch
      %78 = sbr.rel (0) target = $region41
    $region40: #{tpu_custom_call.1} parent=1 // pred_region
      %79 = dma.done [#allocation9], 1024
    $region41: #{tpu_custom_call.1} parent=1 // pred_fallthru
      _
    %p81 = scmp.eq.s32.totalorder 0, 0
    // Predicated region
    $region42: #{tpu_custom_call.1} parent=1 // pred_check
      %p82 = pneg %p81
    $region43: #{tpu_custom_call.1} parent=1 // pred_check_branch
      %84 = sbr.rel (%p82) target = $region45
    $region44: #{tpu_custom_call.1} parent=1 // pred_region
      %v85 = vld [vmem:[#allocation5] sm:$0xff]
      %86 = vst [vmem:[#allocation11] sm:$0xff] %v85
    $region45: #{tpu_custom_call.1} parent=1 // pred_fallthru
      _
    %v87 = vld [vmem:[#allocation7] sm:$0xf]
    %v88 = vld [vmem:[#allocation7 + $0x4] sm:$0xf]
    %v89 = vld [vmem:[#allocation7 + $0x8] sm:$0xf]
    %v90 = vld [vmem:[#allocation7 + $0xc] sm:$0xf]
    %v91 = vld [vmem:[#allocation8] sm:$0xf]
    %v92 = vld [vmem:[#allocation8 + $0x4] sm:$0xf]
    %v93 = vld [vmem:[#allocation8 + $0x8] sm:$0xf]
    %v94 = vld [vmem:[#allocation8 + $0xc] sm:$0xf]
    %v95 = vld [vmem:[#allocation8 + $0x10] sm:$0xf]
    %v96 = vld [vmem:[#allocation8 + $0x14] sm:$0xf]
    %v97 = vld [vmem:[#allocation8 + $0x18] sm:$0xf]
    %v98 = vld [vmem:[#allocation8 + $0x1c] sm:$0xf]
    %v99 = vld [vmem:[#allocation8 + $0x20] sm:$0xf]
    %v100 = vld [vmem:[#allocation8 + $0x24] sm:$0xf]
    %v101 = vld [vmem:[#allocation8 + $0x28] sm:$0xf]
    %v102 = vld [vmem:[#allocation8 + $0x2c] sm:$0xf]
    %v103 = vld [vmem:[#allocation8 + $0x30] sm:$0xf]
    %v104 = vld [vmem:[#allocation8 + $0x34] sm:$0xf]
    %v105 = vld [vmem:[#allocation8 + $0x38] sm:$0xf]
    %v106 = vld [vmem:[#allocation8 + $0x3c] sm:$0xf]
    %v107 = vld [vmem:[%s4] sm:$0x1]
    %v108 = vld [vmem:[%s5] sm:$0x1]
    %v109 = vld [vmem:[#allocation2] sm:$0xf]
    %v110 = vld [vmem:[#allocation11] sm:$0xff]
    %v111 = vpack.c.bf16 %v110, %v110
    %v128 = vunpack.c.l.b16 %v91
    %v129 = vunpack.c.l.b16 %v92
    %v130 = vunpack.c.l.b16 %v93
    %v131 = vunpack.c.l.b16 %v94
    %v132 = vunpack.c.l.b16 %v95
    %v133 = vunpack.c.l.b16 %v96
    %v134 = vunpack.c.l.b16 %v97
    %v135 = vunpack.c.l.b16 %v98
    %v136 = vunpack.c.l.b16 %v99
    %v137 = vunpack.c.l.b16 %v100
    %v138 = vunpack.c.l.b16 %v101
    %v139 = vunpack.c.l.b16 %v102
    %v140 = vunpack.c.l.b16 %v103
    %v141 = vunpack.c.l.b16 %v104
    %v142 = vunpack.c.l.b16 %v105
    %v143 = vunpack.c.l.b16 %v106
    %v144 = vpack.c.b16 %v129, %v128
    %v145 = vpack.c.b16 %v131, %v130
    %v146 = vpack.c.b16 %v133, %v132
    %v147 = vpack.c.b16 %v135, %v134
    %v148 = vpack.c.b16 %v137, %v136
    %v149 = vpack.c.b16 %v139, %v138
    %v150 = vpack.c.b16 %v141, %v140
    %v151 = vpack.c.b16 %v143, %v142
    %160 = vmatprep.subr.bf16.mxu0 0
    %161 = vmatpush1.bf16.msra.mxu0 %v151
    %162 = vmatprep.subr.bf16.mxu0 0
    %163 = vmatpush1.bf16.msra.mxu0 %v150
    %164 = vmatprep.subr.bf16.mxu0 0
    %165 = vmatpush1.bf16.msra.mxu0 %v149
    %166 = vmatprep.subr.bf16.mxu0 0
    %167 = vmatpush1.bf16.msra.mxu0 %v148
    %168 = vmatprep.subr.bf16.mxu0 0
    %169 = vmatpush1.bf16.msra.mxu0 %v147
    %170 = vmatprep.subr.bf16.mxu0 0
    %171 = vmatpush1.bf16.msra.mxu0 %v146
    %172 = vmatprep.subr.bf16.mxu0 0
    %173 = vmatpush1.bf16.msra.mxu0 %v145
    %174 = vmatprep.subr.bf16.mxu0 0
    %175 = vmatpush1.bf16.msra.mxu0 %v144
    %176 = vmatprep.subr.bf16.mxu0 0
    %177 = vmatpush2.bf16.msra.mxu0 0
    %178 = vmatprep.subr.bf16.mxu0 0
    %179 = vmatpush2.bf16.msra.mxu0 0
    %180 = vmatprep.subr.bf16.mxu0 0
    %181 = vmatpush2.bf16.msra.mxu0 0
    %182 = vmatprep.subr.bf16.mxu0 0
    %183 = vmatpush2.bf16.msra.mxu0 0
    %184 = vmatprep.subr.bf16.mxu0 0
    %185 = vmatpush2.bf16.msra.mxu0 0
    %186 = vmatprep.subr.bf16.mxu0 0
    %187 = vmatpush2.bf16.msra.mxu0 0
    %188 = vmatprep.subr.bf16.mxu0 0
    %189 = vmatpush2.bf16.msra.mxu0 0
    %190 = vmatprep.subr.bf16.mxu0 0
    %191 = vmatpush2.bf16.msra.mxu0 0
    %192 = vmatprep.mubr.bf16.mxu0 0
    %193 = vmatmul.mubr.bf16.gmra.mxu0 %v111
    %v194 = vpop.f32.mrf.mxu0
    %v195 = vadd.f32 0.0, %v194
    %v196 = vpop.f32.mrf.mxu0
    %v197 = vpop.f32.mrf.mxu0
    %v198 = vpop.f32.mrf.mxu0
    %199 = vdwg.mxu0
    %v204 = vunpack.c.l.b16 %v87
    %v205 = vunpack.c.l.b16 %v88
    %v206 = vunpack.c.l.b16 %v89
    %v207 = vunpack.c.l.b16 %v90
    %v208 = vpack.c.b16 %v205, %v204
    %v209 = vpack.c.b16 %v207, %v206
    %vm212 = vcmask 261120
    %v214 = vsel %vm212, %v109, 0
    %216 = vmatprep.subr.bf16.mxu0 0
    %217 = vmatpush1.bf16.msra.mxu0 0
    %218 = vmatprep.subr.bf16.mxu0 0
    %219 = vmatpush1.bf16.msra.mxu0 0
    %220 = vmatprep.subr.bf16.mxu0 0
    %221 = vmatpush1.bf16.msra.mxu0 0
    %222 = vmatprep.subr.bf16.mxu0 0
    %223 = vmatpush1.bf16.msra.mxu0 0
    %224 = vmatprep.subr.bf16.mxu0 0
    %225 = vmatpush1.bf16.msra.mxu0 0
    %226 = vmatprep.subr.bf16.mxu0 0
    %227 = vmatpush1.bf16.msra.mxu0 0
    %228 = vmatprep.subr.bf16.mxu0 0
    %229 = vmatpush1.bf16.msra.mxu0 %v209
    %230 = vmatprep.subr.bf16.mxu0 0
    %231 = vmatpush1.bf16.msra.mxu0 %v208
    %232 = vmatprep.subr.bf16.mxu0 0
    %233 = vmatpush2.bf16.msra.mxu0 0
    %234 = vmatprep.subr.bf16.mxu0 0
    %235 = vmatpush2.bf16.msra.mxu0 0
    %236 = vmatprep.subr.bf16.mxu0 0
    %237 = vmatpush2.bf16.msra.mxu0 0
    %238 = vmatprep.subr.bf16.mxu0 0
    %239 = vmatpush2.bf16.msra.mxu0 0
    %240 = vmatprep.subr.bf16.mxu0 0
    %241 = vmatpush2.bf16.msra.mxu0 0
    %242 = vmatprep.subr.bf16.mxu0 0
    %243 = vmatpush2.bf16.msra.mxu0 0
    %244 = vmatprep.subr.bf16.mxu0 0
    %245 = vmatpush2.bf16.msra.mxu0 0
    %246 = vmatprep.subr.bf16.mxu0 0
    %247 = vmatpush2.bf16.msra.mxu0 0
    %248 = vmatprep.mubr.bf16.mxu0 0
    %249 = vmatmul.mubr.bf16.gmra.mxu0 %v214
    %v250 = vpop.f32.mrf.mxu0
    %v251 = vadd.f32 %v195, %v250
    %v252 = vpop.f32.mrf.mxu0
    %v253 = vpop.f32.mrf.mxu0
    %v254 = vpop.f32.mrf.mxu0
    %255 = vdwg.mxu0
    %v257 = vlaneseq
    %v258 = vshrl.u32 %v257, 7
    %v259 = vsub.s32 0, %v258
    %v260 = vrot.slane %v107, %v259
    %v262 = vadd.f32 %v251, %v260
    %263 = vst [vmem:[#allocation11] sm:$0xff] %v262
    %v265 = vlaneseq
    %v266 = vshrl.u32 %v265, 7
    %v267 = vsub.s32 0, %v266
    %v268 = vrot.slane %v108, %v267
    %v270 = vadd.f32 %v262, %v268
    %271 = vmax.xlane.f32.xlu0 %v270
    %v272 = vpop.xlane.xlu0 %271
    %v273 = vsub.f32 %v270, %v272
    %v274 = vmul.f32 %v273, 1.442695
    %v275 = vpow.pop %v274
    %276 = vadd.xlane.f32.xlu0 %v275
    %v277 = vpop.xlane.xlu0 %276
    %v278 = vlog2.pop %v277
    %v279 = vmul.f32 %v278, 0.6931472
    %v280 = vadd.f32 %v272, %v279
    %v281 = vsub.f32 %v262, %v280
    %282 = vst [vmem:[#allocation10] sm:$0xff] %v281
    %s283 = scalar_lea.vmem [#allocation2], 4
    %v284 = vld [vmem:[%s283] sm:$0xf]
    %v285 = vld [vmem:[#allocation11] sm:$0xff]
    %v286 = vpack.c.bf16 %v285, %v285
    %287 = vmatprep.subr.bf16.mxu0 0
    %288 = vmatpush1.bf16.msra.mxu0 %v151
    %289 = vmatprep.subr.bf16.mxu0 0
    %290 = vmatpush1.bf16.msra.mxu0 %v150
    %291 = vmatprep.subr.bf16.mxu0 0
    %292 = vmatpush1.bf16.msra.mxu0 %v149
    %293 = vmatprep.subr.bf16.mxu0 0
    %294 = vmatpush1.bf16.msra.mxu0 %v148
    %295 = vmatprep.subr.bf16.mxu0 0
    %296 = vmatpush1.bf16.msra.mxu0 %v147
    %297 = vmatprep.subr.bf16.mxu0 0
    %298 = vmatpush1.bf16.msra.mxu0 %v146
    %299 = vmatprep.subr.bf16.mxu0 0
    %300 = vmatpush1.bf16.msra.mxu0 %v145
    %301 = vmatprep.subr.bf16.mxu0 0
    %302 = vmatpush1.bf16.msra.mxu0 %v144
    %303 = vmatprep.subr.bf16.mxu0 0
    %304 = vmatpush2.bf16.msra.mxu0 0
    %305 = vmatprep.subr.bf16.mxu0 0
    %306 = vmatpush2.bf16.msra.mxu0 0
    %307 = vmatprep.subr.bf16.mxu0 0
    %308 = vmatpush2.bf16.msra.mxu0 0
    %309 = vmatprep.subr.bf16.mxu0 0
    %310 = vmatpush2.bf16.msra.mxu0 0
    %311 = vmatprep.subr.bf16.mxu0 0
    %312 = vmatpush2.bf16.msra.mxu0 0
    %313 = vmatprep.subr.bf16.mxu0 0
    %314 = vmatpush2.bf16.msra.mxu0 0
    %315 = vmatprep.subr.bf16.mxu0 0
    %316 = vmatpush2.bf16.msra.mxu0 0
    %317 = vmatprep.subr.bf16.mxu0 0
    %318 = vmatpush2.bf16.msra.mxu0 0
    %319 = vmatprep.mubr.bf16.mxu0 0
    %320 = vmatmul.mubr.bf16.gmra.mxu0 %v286
    %v321 = vpop.f32.mrf.mxu0
    %v322 = vadd.f32 0.0, %v321
    %v323 = vpop.f32.mrf.mxu0
    %v324 = vpop.f32.mrf.mxu0
    %v325 = vpop.f32.mrf.mxu0
    %326 = vdwg.mxu0
    %v328 = vsel %vm212, %v284, 0
    %330 = vmatprep.subr.bf16.mxu0 0
    %331 = vmatpush1.bf16.msra.mxu0 0
    %332 = vmatprep.subr.bf16.mxu0 0
    %333 = vmatpush1.bf16.msra.mxu0 0
    %334 = vmatprep.subr.bf16.mxu0 0
    %335 = vmatpush1.bf16.msra.mxu0 0
    %336 = vmatprep.subr.bf16.mxu0 0
    %337 = vmatpush1.bf16.msra.mxu0 0
    %338 = vmatprep.subr.bf16.mxu0 0
    %339 = vmatpush1.bf16.msra.mxu0 0
    %340 = vmatprep.subr.bf16.mxu0 0
    %341 = vmatpush1.bf16.msra.mxu0 0
    %342 = vmatprep.subr.bf16.mxu0 0
    %343 = vmatpush1.bf16.msra.mxu0 %v209
    %344 = vmatprep.subr.bf16.mxu0 0
    %345 = vmatpush1.bf16.msra.mxu0 %v208
    %346 = vmatprep.subr.bf16.mxu0 0
    %347 = vmatpush2.bf16.msra.mxu0 0
    %348 = vmatprep.subr.bf16.mxu0 0
    %349 = vmatpush2.bf16.msra.mxu0 0
    %350 = vmatprep.subr.bf16.mxu0 0
    %351 = vmatpush2.bf16.msra.mxu0 0
    %352 = vmatprep.subr.bf16.mxu0 0
    %353 = vmatpush2.bf16.msra.mxu0 0
    %354 = vmatprep.subr.bf16.mxu0 0
    %355 = vmatpush2.bf16.msra.mxu0 0
    %356 = vmatprep.subr.bf16.mxu0 0
    %357 = vmatpush2.bf16.msra.mxu0 0
    %358 = vmatprep.subr.bf16.mxu0 0
    %359 = vmatpush2.bf16.msra.mxu0 0
    %360 = vmatprep.subr.bf16.mxu0 0
    %361 = vmatpush2.bf16.msra.mxu0 0
    %362 = vmatprep.mubr.bf16.mxu0 0
    %363 = vmatmul.mubr.bf16.gmra.mxu0 %v328
    %v364 = vpop.f32.mrf.mxu0
    %v365 = vadd.f32 %v322, %v364
    %v366 = vpop.f32.mrf.mxu0
    %v367 = vpop.f32.mrf.mxu0
    %v368 = vpop.f32.mrf.mxu0
    %369 = vdwg.mxu0
    %v370 = vadd.f32 %v365, %v260
    %371 = vst [vmem:[#allocation11] sm:$0xff] %v370
    %v372 = vadd.f32 %v370, %v268
    %373 = vmax.xlane.f32.xlu0 %v372
    %v374 = vpop.xlane.xlu0 %373
    %v375 = vsub.f32 %v372, %v374
    %v376 = vmul.f32 %v375, 1.442695
    %v377 = vpow.pop %v376
    %378 = vadd.xlane.f32.xlu0 %v377
    %v379 = vpop.xlane.xlu0 %378
    %v380 = vlog2.pop %v379
    %v381 = vmul.f32 %v380, 0.6931472
    %v382 = vadd.f32 %v374, %v381
    %v383 = vsub.f32 %v370, %v382
    %s384 = scalar_lea.vmem [#allocation10], 8
    %385 = vst [vmem:[%s384] sm:$0xff] %v383
    %s386 = scalar_lea.vmem [#allocation2], 8
    %v387 = vld [vmem:[%s386] sm:$0xf]
    %v388 = vld [vmem:[#allocation11] sm:$0xff]
    %v389 = vpack.c.bf16 %v388, %v388
    %390 = vmatprep.subr.bf16.mxu0 0
    %391 = vmatpush1.bf16.msra.mxu0 %v151
    %392 = vmatprep.subr.bf16.mxu0 0
    %393 = vmatpush1.bf16.msra.mxu0 %v150
    %394 = vmatprep.subr.bf16.mxu0 0
    %395 = vmatpush1.bf16.msra.mxu0 %v149
    %396 = vmatprep.subr.bf16.mxu0 0
    %397 = vmatpush1.bf16.msra.mxu0 %v148
    %398 = vmatprep.subr.bf16.mxu0 0
    %399 = vmatpush1.bf16.msra.mxu0 %v147
    %400 = vmatprep.subr.bf16.mxu0 0
    %401 = vmatpush1.bf16.msra.mxu0 %v146
    %402 = vmatprep.subr.bf16.mxu0 0
    %403 = vmatpush1.bf16.msra.mxu0 %v145
    %404 = vmatprep.subr.bf16.mxu0 0
    %405 = vmatpush1.bf16.msra.mxu0 %v144
    %406 = vmatprep.subr.bf16.mxu0 0
    %407 = vmatpush2.bf16.msra.mxu0 0
    %408 = vmatprep.subr.bf16.mxu0 0
    %409 = vmatpush2.bf16.msra.mxu0 0
    %410 = vmatprep.subr.bf16.mxu0 0
    %411 = vmatpush2.bf16.msra.mxu0 0
    %412 = vmatprep.subr.bf16.mxu0 0
    %413 = vmatpush2.bf16.msra.mxu0 0
    %414 = vmatprep.subr.bf16.mxu0 0
    %415 = vmatpush2.bf16.msra.mxu0 0
    %416 = vmatprep.subr.bf16.mxu0 0
    %417 = vmatpush2.bf16.msra.mxu0 0
    %418 = vmatprep.subr.bf16.mxu0 0
    %419 = vmatpush2.bf16.msra.mxu0 0
    %420 = vmatprep.subr.bf16.mxu0 0
    %421 = vmatpush2.bf16.msra.mxu0 0
    %422 = vmatprep.mubr.bf16.mxu0 0
    %423 = vmatmul.mubr.bf16.gmra.mxu0 %v389
    %v424 = vpop.f32.mrf.mxu0
    %v425 = vadd.f32 0.0, %v424
    %v426 = vpop.f32.mrf.mxu0
    %v427 = vpop.f32.mrf.mxu0
    %v428 = vpop.f32.mrf.mxu0
    %429 = vdwg.mxu0
    %v431 = vsel %vm212, %v387, 0
    %433 = vmatprep.subr.bf16.mxu0 0
    %434 = vmatpush1.bf16.msra.mxu0 0
    %435 = vmatprep.subr.bf16.mxu0 0
    %436 = vmatpush1.bf16.msra.mxu0 0
    %437 = vmatprep.subr.bf16.mxu0 0
    %438 = vmatpush1.bf16.msra.mxu0 0
    %439 = vmatprep.subr.bf16.mxu0 0
    %440 = vmatpush1.bf16.msra.mxu0 0
    %441 = vmatprep.subr.bf16.mxu0 0
    %442 = vmatpush1.bf16.msra.mxu0 0
    %443 = vmatprep.subr.bf16.mxu0 0
    %444 = vmatpush1.bf16.msra.mxu0 0
    %445 = vmatprep.subr.bf16.mxu0 0
    %446 = vmatpush1.bf16.msra.mxu0 %v209
    %447 = vmatprep.subr.bf16.mxu0 0
    %448 = vmatpush1.bf16.msra.mxu0 %v208
    %449 = vmatprep.subr.bf16.mxu0 0
    %450 = vmatpush2.bf16.msra.mxu0 0
    %451 = vmatprep.subr.bf16.mxu0 0
    %452 = vmatpush2.bf16.msra.mxu0 0
    %453 = vmatprep.subr.bf16.mxu0 0
    %454 = vmatpush2.bf16.msra.mxu0 0
    %455 = vmatprep.subr.bf16.mxu0 0
    %456 = vmatpush2.bf16.msra.mxu0 0
    %457 = vmatprep.subr.bf16.mxu0 0
    %458 = vmatpush2.bf16.msra.mxu0 0
    %459 = vmatprep.subr.bf16.mxu0 0
    %460 = vmatpush2.bf16.msra.mxu0 0
    %461 = vmatprep.subr.bf16.mxu0 0
    %462 = vmatpush2.bf16.msra.mxu0 0
    %463 = vmatprep.subr.bf16.mxu0 0
    %464 = vmatpush2.bf16.msra.mxu0 0
    %465 = vmatprep.mubr.bf16.mxu0 0
    %466 = vmatmul.mubr.bf16.gmra.mxu0 %v431
    %v467 = vpop.f32.mrf.mxu0
    %v468 = vadd.f32 %v425, %v467
    %v469 = vpop.f32.mrf.mxu0
    %v470 = vpop.f32.mrf.mxu0
    %v471 = vpop.f32.mrf.mxu0
    %472 = vdwg.mxu0
    %v473 = vadd.f32 %v468, %v260
    %474 = vst [vmem:[#allocation11] sm:$0xff] %v473
    %v475 = vadd.f32 %v473, %v268
    %476 = vmax.xlane.f32.xlu0 %v475
    %v477 = vpop.xlane.xlu0 %476
    %v478 = vsub.f32 %v475, %v477
    %v479 = vmul.f32 %v478, 1.442695
    %v480 = vpow.pop %v479
    %481 = vadd.xlane.f32.xlu0 %v480
    %v482 = vpop.xlane.xlu0 %481
    %v483 = vlog2.pop %v482
    %v484 = vmul.f32 %v483, 0.6931472
    %v485 = vadd.f32 %v477, %v484
    %v486 = vsub.f32 %v473, %v485
    %s487 = scalar_lea.vmem [#allocation10], 16
    %488 = vst [vmem:[%s487] sm:$0xff] %v486
    %s489 = scalar_lea.vmem [#allocation2], 12
    %v490 = vld [vmem:[%s489] sm:$0xf]
    %v491 = vld [vmem:[#allocation11] sm:$0xff]
    %v492 = vpack.c.bf16 %v491, %v491
    %493 = vmatprep.subr.bf16.mxu0 0
    %494 = vmatpush1.bf16.msra.mxu0 %v151
    %495 = vmatprep.subr.bf16.mxu0 0
    %496 = vmatpush1.bf16.msra.mxu0 %v150
    %497 = vmatprep.subr.bf16.mxu0 0
    %498 = vmatpush1.bf16.msra.mxu0 %v149
    %499 = vmatprep.subr.bf16.mxu0 0
    %500 = vmatpush1.bf16.msra.mxu0 %v148
    %501 = vmatprep.subr.bf16.mxu0 0
    %502 = vmatpush1.bf16.msra.mxu0 %v147
    %503 = vmatprep.subr.bf16.mxu0 0
    %504 = vmatpush1.bf16.msra.mxu0 %v146
    %505 = vmatprep.subr.bf16.mxu0 0
    %506 = vmatpush1.bf16.msra.mxu0 %v145
    %507 = vmatprep.subr.bf16.mxu0 0
    %508 = vmatpush1.bf16.msra.mxu0 %v144
    %509 = vmatprep.subr.bf16.mxu0 0
    %510 = vmatpush2.bf16.msra.mxu0 0
    %511 = vmatprep.subr.bf16.mxu0 0
    %512 = vmatpush2.bf16.msra.mxu0 0
    %513 = vmatprep.subr.bf16.mxu0 0
    %514 = vmatpush2.bf16.msra.mxu0 0
    %515 = vmatprep.subr.bf16.mxu0 0
    %516 = vmatpush2.bf16.msra.mxu0 0
    %517 = vmatprep.subr.bf16.mxu0 0
    %518 = vmatpush2.bf16.msra.mxu0 0
    %519 = vmatprep.subr.bf16.mxu0 0
    %520 = vmatpush2.bf16.msra.mxu0 0
    %521 = vmatprep.subr.bf16.mxu0 0
    %522 = vmatpush2.bf16.msra.mxu0 0
    %523 = vmatprep.subr.bf16.mxu0 0
    %524 = vmatpush2.bf16.msra.mxu0 0
    %525 = vmatprep.mubr.bf16.mxu0 0
    %526 = vmatmul.mubr.bf16.gmra.mxu0 %v492
    %v527 = vpop.f32.mrf.mxu0
    %v528 = vadd.f32 0.0, %v527
    %v529 = vpop.f32.mrf.mxu0
    %v530 = vpop.f32.mrf.mxu0
    %v531 = vpop.f32.mrf.mxu0
    %532 = vdwg.mxu0
    %v534 = vsel %vm212, %v490, 0
    %536 = vmatprep.subr.bf16.mxu0 0
    %537 = vmatpush1.bf16.msra.mxu0 0
    %538 = vmatprep.subr.bf16.mxu0 0
    %539 = vmatpush1.bf16.msra.mxu0 0
    %540 = vmatprep.subr.bf16.mxu0 0
    %541 = vmatpush1.bf16.msra.mxu0 0
    %542 = vmatprep.subr.bf16.mxu0 0
    %543 = vmatpush1.bf16.msra.mxu0 0
    %544 = vmatprep.subr.bf16.mxu0 0
    %545 = vmatpush1.bf16.msra.mxu0 0
    %546 = vmatprep.subr.bf16.mxu0 0
    %547 = vmatpush1.bf16.msra.mxu0 0
    %548 = vmatprep.subr.bf16.mxu0 0
    %549 = vmatpush1.bf16.msra.mxu0 %v209
    %550 = vmatprep.subr.bf16.mxu0 0
    %551 = vmatpush1.bf16.msra.mxu0 %v208
    %552 = vmatprep.subr.bf16.mxu0 0
    %553 = vmatpush2.bf16.msra.mxu0 0
    %554 = vmatprep.subr.bf16.mxu0 0
    %555 = vmatpush2.bf16.msra.mxu0 0
    %556 = vmatprep.subr.bf16.mxu0 0
    %557 = vmatpush2.bf16.msra.mxu0 0
    %558 = vmatprep.subr.bf16.mxu0 0
    %559 = vmatpush2.bf16.msra.mxu0 0
    %560 = vmatprep.subr.bf16.mxu0 0
    %561 = vmatpush2.bf16.msra.mxu0 0
    %562 = vmatprep.subr.bf16.mxu0 0
    %563 = vmatpush2.bf16.msra.mxu0 0
    %564 = vmatprep.subr.bf16.mxu0 0
    %565 = vmatpush2.bf16.msra.mxu0 0
    %566 = vmatprep.subr.bf16.mxu0 0
    %567 = vmatpush2.bf16.msra.mxu0 0
    %568 = vmatprep.mubr.bf16.mxu0 0
    %569 = vmatmul.mubr.bf16.gmra.mxu0 %v534
    %v570 = vpop.f32.mrf.mxu0
    %v571 = vadd.f32 %v528, %v570
    %v572 = vpop.f32.mrf.mxu0
    %v573 = vpop.f32.mrf.mxu0
    %v574 = vpop.f32.mrf.mxu0
    %575 = vdwg.mxu0
    %v576 = vadd.f32 %v571, %v260
    %577 = vst [vmem:[#allocation11] sm:$0xff] %v576
    %v578 = vadd.f32 %v576, %v268
    %579 = vmax.xlane.f32.xlu0 %v578
    %v580 = vpop.xlane.xlu0 %579
    %v581 = vsub.f32 %v578, %v580
    %v582 = vmul.f32 %v581, 1.442695
    %v583 = vpow.pop %v582
    %584 = vadd.xlane.f32.xlu0 %v583
    %v585 = vpop.xlane.xlu0 %584
    %v586 = vlog2.pop %v585
    %v587 = vmul.f32 %v586, 0.6931472
    %v588 = vadd.f32 %v580, %v587
    %v589 = vsub.f32 %v576, %v588
    %s590 = scalar_lea.vmem [#allocation10], 24
    %591 = vst [vmem:[%s590] sm:$0xff] %v589
    %s592 = scalar_lea.vmem [#allocation2], 16
    %v593 = vld [vmem:[%s592] sm:$0xf]
    %v594 = vld [vmem:[#allocation11] sm:$0xff]
    %v595 = vpack.c.bf16 %v594, %v594
    %596 = vmatprep.subr.bf16.mxu0 0
    %597 = vmatpush1.bf16.msra.mxu0 %v151
    %598 = vmatprep.subr.bf16.mxu0 0
    %599 = vmatpush1.bf16.msra.mxu0 %v150
    %600 = vmatprep.subr.bf16.mxu0 0
    %601 = vmatpush1.bf16.msra.mxu0 %v149
    %602 = vmatprep.subr.bf16.mxu0 0
    %603 = vmatpush1.bf16.msra.mxu0 %v148
    %604 = vmatprep.subr.bf16.mxu0 0
    %605 = vmatpush1.bf16.msra.mxu0 %v147
    %606 = vmatprep.subr.bf16.mxu0 0
    %607 = vmatpush1.bf16.msra.mxu0 %v146
    %608 = vmatprep.subr.bf16.mxu0 0
    %609 = vmatpush1.bf16.msra.mxu0 %v145
    %610 = vmatprep.subr.bf16.mxu0 0
    %611 = vmatpush1.bf16.msra.mxu0 %v144
    %612 = vmatprep.subr.bf16.mxu0 0
    %613 = vmatpush2.bf16.msra.mxu0 0
    %614 = vmatprep.subr.bf16.mxu0 0
    %615 = vmatpush2.bf16.msra.mxu0 0
    %616 = vmatprep.subr.bf16.mxu0 0
    %617 = vmatpush2.bf16.msra.mxu0 0
    %618 = vmatprep.subr.bf16.mxu0 0
    %619 = vmatpush2.bf16.msra.mxu0 0
    %620 = vmatprep.subr.bf16.mxu0 0
    %621 = vmatpush2.bf16.msra.mxu0 0
    %622 = vmatprep.subr.bf16.mxu0 0
    %623 = vmatpush2.bf16.msra.mxu0 0
    %624 = vmatprep.subr.bf16.mxu0 0
    %625 = vmatpush2.bf16.msra.mxu0 0
    %626 = vmatprep.subr.bf16.mxu0 0
    %627 = vmatpush2.bf16.msra.mxu0 0
    %628 = vmatprep.mubr.bf16.mxu0 0
    %629 = vmatmul.mubr.bf16.gmra.mxu0 %v595
    %v630 = vpop.f32.mrf.mxu0
    %v631 = vadd.f32 0.0, %v630
    %v632 = vpop.f32.mrf.mxu0
    %v633 = vpop.f32.mrf.mxu0
    %v634 = vpop.f32.mrf.mxu0
    %635 = vdwg.mxu0
    %v637 = vsel %vm212, %v593, 0
    %639 = vmatprep.subr.bf16.mxu0 0
    %640 = vmatpush1.bf16.msra.mxu0 0
    %641 = vmatprep.subr.bf16.mxu0 0
    %642 = vmatpush1.bf16.msra.mxu0 0
    %643 = vmatprep.subr.bf16.mxu0 0
    %644 = vmatpush1.bf16.msra.mxu0 0
    %645 = vmatprep.subr.bf16.mxu0 0
    %646 = vmatpush1.bf16.msra.mxu0 0
    %647 = vmatprep.subr.bf16.mxu0 0
    %648 = vmatpush1.bf16.msra.mxu0 0
    %649 = vmatprep.subr.bf16.mxu0 0
    %650 = vmatpush1.bf16.msra.mxu0 0
    %651 = vmatprep.subr.bf16.mxu0 0
    %652 = vmatpush1.bf16.msra.mxu0 %v209
    %653 = vmatprep.subr.bf16.mxu0 0
    %654 = vmatpush1.bf16.msra.mxu0 %v208
    %655 = vmatprep.subr.bf16.mxu0 0
    %656 = vmatpush2.bf16.msra.mxu0 0
    %657 = vmatprep.subr.bf16.mxu0 0
    %658 = vmatpush2.bf16.msra.mxu0 0
    %659 = vmatprep.subr.bf16.mxu0 0
    %660 = vmatpush2.bf16.msra.mxu0 0
    %661 = vmatprep.subr.bf16.mxu0 0
    %662 = vmatpush2.bf16.msra.mxu0 0
    %663 = vmatprep.subr.bf16.mxu0 0
    %664 = vmatpush2.bf16.msra.mxu0 0
    %665 = vmatprep.subr.bf16.mxu0 0
    %666 = vmatpush2.bf16.msra.mxu0 0
    %667 = vmatprep.subr.bf16.mxu0 0
    %668 = vmatpush2.bf16.msra.mxu0 0
    %669 = vmatprep.subr.bf16.mxu0 0
    %670 = vmatpush2.bf16.msra.mxu0 0
    %671 = vmatprep.mubr.bf16.mxu0 0
    %672 = vmatmul.mubr.bf16.gmra.mxu0 %v637
    %v673 = vpop.f32.mrf.mxu0
    %v674 = vadd.f32 %v631, %v673
    %v675 = vpop.f32.mrf.mxu0
    %v676 = vpop.f32.mrf.mxu0
    %v677 = vpop.f32.mrf.mxu0
    %678 = vdwg.mxu0
    %v679 = vadd.f32 %v674, %v260
    %680 = vst [vmem:[#allocation11] sm:$0xff] %v679
    %v681 = vadd.f32 %v679, %v268
    %682 = vmax.xlane.f32.xlu0 %v681
    %v683 = vpop.xlane.xlu0 %682
    %v684 = vsub.f32 %v681, %v683
    %v685 = vmul.f32 %v684, 1.442695
    %v686 = vpow.pop %v685
    %687 = vadd.xlane.f32.xlu0 %v686
    %v688 = vpop.xlane.xlu0 %687
    %v689 = vlog2.pop %v688
    %v690 = vmul.f32 %v689, 0.6931472
    %v691 = vadd.f32 %v683, %v690
    %v692 = vsub.f32 %v679, %v691
    %s693 = scalar_lea.vmem [#allocation10], 32
    %694 = vst [vmem:[%s693] sm:$0xff] %v692
    %s695 = scalar_lea.vmem [#allocation2], 20
    %v696 = vld [vmem:[%s695] sm:$0xf]
    %v697 = vld [vmem:[#allocation11] sm:$0xff]
    %v698 = vpack.c.bf16 %v697, %v697
    %699 = vmatprep.subr.bf16.mxu0 0
    %700 = vmatpush1.bf16.msra.mxu0 %v151
    %701 = vmatprep.subr.bf16.mxu0 0
    %702 = vmatpush1.bf16.msra.mxu0 %v150
    %703 = vmatprep.subr.bf16.mxu0 0
    %704 = vmatpush1.bf16.msra.mxu0 %v149
    %705 = vmatprep.subr.bf16.mxu0 0
    %706 = vmatpush1.bf16.msra.mxu0 %v148
    %707 = vmatprep.subr.bf16.mxu0 0
    %708 = vmatpush1.bf16.msra.mxu0 %v147
    %709 = vmatprep.subr.bf16.mxu0 0
    %710 = vmatpush1.bf16.msra.mxu0 %v146
    %711 = vmatprep.subr.bf16.mxu0 0
    %712 = vmatpush1.bf16.msra.mxu0 %v145
    %713 = vmatprep.subr.bf16.mxu0 0
    %714 = vmatpush1.bf16.msra.mxu0 %v144
    %715 = vmatprep.subr.bf16.mxu0 0
    %716 = vmatpush2.bf16.msra.mxu0 0
    %717 = vmatprep.subr.bf16.mxu0 0
    %718 = vmatpush2.bf16.msra.mxu0 0
    %719 = vmatprep.subr.bf16.mxu0 0
    %720 = vmatpush2.bf16.msra.mxu0 0
    %721 = vmatprep.subr.bf16.mxu0 0
    %722 = vmatpush2.bf16.msra.mxu0 0
    %723 = vmatprep.subr.bf16.mxu0 0
    %724 = vmatpush2.bf16.msra.mxu0 0
    %725 = vmatprep.subr.bf16.mxu0 0
    %726 = vmatpush2.bf16.msra.mxu0 0
    %727 = vmatprep.subr.bf16.mxu0 0
    %728 = vmatpush2.bf16.msra.mxu0 0
    %729 = vmatprep.subr.bf16.mxu0 0
    %730 = vmatpush2.bf16.msra.mxu0 0
    %731 = vmatprep.mubr.bf16.mxu0 0
    %732 = vmatmul.mubr.bf16.gmra.mxu0 %v698
    %v733 = vpop.f32.mrf.mxu0
    %v734 = vadd.f32 0.0, %v733
    %v735 = vpop.f32.mrf.mxu0
    %v736 = vpop.f32.mrf.mxu0
    %v737 = vpop.f32.mrf.mxu0
    %738 = vdwg.mxu0
    %v740 = vsel %vm212, %v696, 0
    %742 = vmatprep.subr.bf16.mxu0 0
    %743 = vmatpush1.bf16.msra.mxu0 0
    %744 = vmatprep.subr.bf16.mxu0 0
    %745 = vmatpush1.bf16.msra.mxu0 0
    %746 = vmatprep.subr.bf16.mxu0 0
    %747 = vmatpush1.bf16.msra.mxu0 0
    %748 = vmatprep.subr.bf16.mxu0 0
    %749 = vmatpush1.bf16.msra.mxu0 0
    %750 = vmatprep.subr.bf16.mxu0 0
    %751 = vmatpush1.bf16.msra.mxu0 0
    %752 = vmatprep.subr.bf16.mxu0 0
    %753 = vmatpush1.bf16.msra.mxu0 0
    %754 = vmatprep.subr.bf16.mxu0 0
    %755 = vmatpush1.bf16.msra.mxu0 %v209
    %756 = vmatprep.subr.bf16.mxu0 0
    %757 = vmatpush1.bf16.msra.mxu0 %v208
    %758 = vmatprep.subr.bf16.mxu0 0
    %759 = vmatpush2.bf16.msra.mxu0 0
    %760 = vmatprep.subr.bf16.mxu0 0
    %761 = vmatpush2.bf16.msra.mxu0 0
    %762 = vmatprep.subr.bf16.mxu0 0
    %763 = vmatpush2.bf16.msra.mxu0 0
    %764 = vmatprep.subr.bf16.mxu0 0
    %765 = vmatpush2.bf16.msra.mxu0 0
    %766 = vmatprep.subr.bf16.mxu0 0
    %767 = vmatpush2.bf16.msra.mxu0 0
    %768 = vmatprep.subr.bf16.mxu0 0
    %769 = vmatpush2.bf16.msra.mxu0 0
    %770 = vmatprep.subr.bf16.mxu0 0
    %771 = vmatpush2.bf16.msra.mxu0 0
    %772 = vmatprep.subr.bf16.mxu0 0
    %773 = vmatpush2.bf16.msra.mxu0 0
    %774 = vmatprep.mubr.bf16.mxu0 0
    %775 = vmatmul.mubr.bf16.gmra.mxu0 %v740
    %v776 = vpop.f32.mrf.mxu0
    %v777 = vadd.f32 %v734, %v776
    %v778 = vpop.f32.mrf.mxu0
    %v779 = vpop.f32.mrf.mxu0
    %v780 = vpop.f32.mrf.mxu0
    %781 = vdwg.mxu0
    %v782 = vadd.f32 %v777, %v260
    %783 = vst [vmem:[#allocation11] sm:$0xff] %v782
    %v784 = vadd.f32 %v782, %v268
    %785 = vmax.xlane.f32.xlu0 %v784
    %v786 = vpop.xlane.xlu0 %785
    %v787 = vsub.f32 %v784, %v786
    %v788 = vmul.f32 %v787, 1.442695
    %v789 = vpow.pop %v788
    %790 = vadd.xlane.f32.xlu0 %v789
    %v791 = vpop.xlane.xlu0 %790
    %v792 = vlog2.pop %v791
    %v793 = vmul.f32 %v792, 0.6931472
    %v794 = vadd.f32 %v786, %v793
    %v795 = vsub.f32 %v782, %v794
    %s796 = scalar_lea.vmem [#allocation10], 40
    %797 = vst [vmem:[%s796] sm:$0xff] %v795
    %s798 = scalar_lea.vmem [#allocation2], 24
    %v799 = vld [vmem:[%s798] sm:$0xf]
    %v800 = vld [vmem:[#allocation11] sm:$0xff]
    %v801 = vpack.c.bf16 %v800, %v800
    %802 = vmatprep.subr.bf16.mxu0 0
    %803 = vmatpush1.bf16.msra.mxu0 %v151
    %804 = vmatprep.subr.bf16.mxu0 0
    %805 = vmatpush1.bf16.msra.mxu0 %v150
    %806 = vmatprep.subr.bf16.mxu0 0
    %807 = vmatpush1.bf16.msra.mxu0 %v149
    %808 = vmatprep.subr.bf16.mxu0 0
    %809 = vmatpush1.bf16.msra.mxu0 %v148
    %810 = vmatprep.subr.bf16.mxu0 0
    %811 = vmatpush1.bf16.msra.mxu0 %v147
    %812 = vmatprep.subr.bf16.mxu0 0
    %813 = vmatpush1.bf16.msra.mxu0 %v146
    %814 = vmatprep.subr.bf16.mxu0 0
    %815 = vmatpush1.bf16.msra.mxu0 %v145
    %816 = vmatprep.subr.bf16.mxu0 0
    %817 = vmatpush1.bf16.msra.mxu0 %v144
    %818 = vmatprep.subr.bf16.mxu0 0
    %819 = vmatpush2.bf16.msra.mxu0 0
    %820 = vmatprep.subr.bf16.mxu0 0
    %821 = vmatpush2.bf16.msra.mxu0 0
    %822 = vmatprep.subr.bf16.mxu0 0
    %823 = vmatpush2.bf16.msra.mxu0 0
    %824 = vmatprep.subr.bf16.mxu0 0
    %825 = vmatpush2.bf16.msra.mxu0 0
    %826 = vmatprep.subr.bf16.mxu0 0
    %827 = vmatpush2.bf16.msra.mxu0 0
    %828 = vmatprep.subr.bf16.mxu0 0
    %829 = vmatpush2.bf16.msra.mxu0 0
    %830 = vmatprep.subr.bf16.mxu0 0
    %831 = vmatpush2.bf16.msra.mxu0 0
    %832 = vmatprep.subr.bf16.mxu0 0
    %833 = vmatpush2.bf16.msra.mxu0 0
    %834 = vmatprep.mubr.bf16.mxu0 0
    %835 = vmatmul.mubr.bf16.gmra.mxu0 %v801
    %v836 = vpop.f32.mrf.mxu0
    %v837 = vadd.f32 0.0, %v836
    %v838 = vpop.f32.mrf.mxu0
    %v839 = vpop.f32.mrf.mxu0
    %v840 = vpop.f32.mrf.mxu0
    %841 = vdwg.mxu0
    %v843 = vsel %vm212, %v799, 0
    %845 = vmatprep.subr.bf16.mxu0 0
    %846 = vmatpush1.bf16.msra.mxu0 0
    %847 = vmatprep.subr.bf16.mxu0 0
    %848 = vmatpush1.bf16.msra.mxu0 0
    %849 = vmatprep.subr.bf16.mxu0 0
    %850 = vmatpush1.bf16.msra.mxu0 0
    %851 = vmatprep.subr.bf16.mxu0 0
    %852 = vmatpush1.bf16.msra.mxu0 0
    %853 = vmatprep.subr.bf16.mxu0 0
    %854 = vmatpush1.bf16.msra.mxu0 0
    %855 = vmatprep.subr.bf16.mxu0 0
    %856 = vmatpush1.bf16.msra.mxu0 0
    %857 = vmatprep.subr.bf16.mxu0 0
    %858 = vmatpush1.bf16.msra.mxu0 %v209
    %859 = vmatprep.subr.bf16.mxu0 0
    %860 = vmatpush1.bf16.msra.mxu0 %v208
    %861 = vmatprep.subr.bf16.mxu0 0
    %862 = vmatpush2.bf16.msra.mxu0 0
    %863 = vmatprep.subr.bf16.mxu0 0
    %864 = vmatpush2.bf16.msra.mxu0 0
    %865 = vmatprep.subr.bf16.mxu0 0
    %866 = vmatpush2.bf16.msra.mxu0 0
    %867 = vmatprep.subr.bf16.mxu0 0
    %868 = vmatpush2.bf16.msra.mxu0 0
    %869 = vmatprep.subr.bf16.mxu0 0
    %870 = vmatpush2.bf16.msra.mxu0 0
    %871 = vmatprep.subr.bf16.mxu0 0
    %872 = vmatpush2.bf16.msra.mxu0 0
    %873 = vmatprep.subr.bf16.mxu0 0
    %874 = vmatpush2.bf16.msra.mxu0 0
    %875 = vmatprep.subr.bf16.mxu0 0
    %876 = vmatpush2.bf16.msra.mxu0 0
    %877 = vmatprep.mubr.bf16.mxu0 0
    %878 = vmatmul.mubr.bf16.gmra.mxu0 %v843
    %v879 = vpop.f32.mrf.mxu0
    %v880 = vadd.f32 %v837, %v879
    %v881 = vpop.f32.mrf.mxu0
    %v882 = vpop.f32.mrf.mxu0
    %v883 = vpop.f32.mrf.mxu0
    %884 = vdwg.mxu0
    %v885 = vadd.f32 %v880, %v260
    %886 = vst [vmem:[#allocation11] sm:$0xff] %v885
    %v887 = vadd.f32 %v885, %v268
    %888 = vmax.xlane.f32.xlu0 %v887
    %v889 = vpop.xlane.xlu0 %888
    %v890 = vsub.f32 %v887, %v889
    %v891 = vmul.f32 %v890, 1.442695
    %v892 = vpow.pop %v891
    %893 = vadd.xlane.f32.xlu0 %v892
    %v894 = vpop.xlane.xlu0 %893
    %v895 = vlog2.pop %v894
    %v896 = vmul.f32 %v895, 0.6931472
    %v897 = vadd.f32 %v889, %v896
    %v898 = vsub.f32 %v885, %v897
    %s899 = scalar_lea.vmem [#allocation10], 48
    %900 = vst [vmem:[%s899] sm:$0xff] %v898
    %s901 = scalar_lea.vmem [#allocation2], 28
    %v902 = vld [vmem:[%s901] sm:$0xf]
    %v903 = vld [vmem:[#allocation11] sm:$0xff]
    %v904 = vpack.c.bf16 %v903, %v903
    %905 = vmatprep.subr.bf16.mxu0 0
    %906 = vmatpush1.bf16.msra.mxu0 %v151
    %907 = vmatprep.subr.bf16.mxu0 0
    %908 = vmatpush1.bf16.msra.mxu0 %v150
    %909 = vmatprep.subr.bf16.mxu0 0
    %910 = vmatpush1.bf16.msra.mxu0 %v149
    %911 = vmatprep.subr.bf16.mxu0 0
    %912 = vmatpush1.bf16.msra.mxu0 %v148
    %913 = vmatprep.subr.bf16.mxu0 0
    %914 = vmatpush1.bf16.msra.mxu0 %v147
    %915 = vmatprep.subr.bf16.mxu0 0
    %916 = vmatpush1.bf16.msra.mxu0 %v146
    %917 = vmatprep.subr.bf16.mxu0 0
    %918 = vmatpush1.bf16.msra.mxu0 %v145
    %919 = vmatprep.subr.bf16.mxu0 0
    %920 = vmatpush1.bf16.msra.mxu0 %v144
    %921 = vmatprep.subr.bf16.mxu0 0
    %922 = vmatpush2.bf16.msra.mxu0 0
    %923 = vmatprep.subr.bf16.mxu0 0
    %924 = vmatpush2.bf16.msra.mxu0 0
    %925 = vmatprep.subr.bf16.mxu0 0
    %926 = vmatpush2.bf16.msra.mxu0 0
    %927 = vmatprep.subr.bf16.mxu0 0
    %928 = vmatpush2.bf16.msra.mxu0 0
    %929 = vmatprep.subr.bf16.mxu0 0
    %930 = vmatpush2.bf16.msra.mxu0 0
    %931 = vmatprep.subr.bf16.mxu0 0
    %932 = vmatpush2.bf16.msra.mxu0 0
    %933 = vmatprep.subr.bf16.mxu0 0
    %934 = vmatpush2.bf16.msra.mxu0 0
    %935 = vmatprep.subr.bf16.mxu0 0
    %936 = vmatpush2.bf16.msra.mxu0 0
    %937 = vmatprep.mubr.bf16.mxu0 0
    %938 = vmatmul.mubr.bf16.gmra.mxu0 %v904
    %v939 = vpop.f32.mrf.mxu0
    %v940 = vadd.f32 0.0, %v939
    %v941 = vpop.f32.mrf.mxu0
    %v942 = vpop.f32.mrf.mxu0
    %v943 = vpop.f32.mrf.mxu0
    %944 = vdwg.mxu0
    %v946 = vsel %vm212, %v902, 0
    %948 = vmatprep.subr.bf16.mxu0 0
    %949 = vmatpush1.bf16.msra.mxu0 0
    %950 = vmatprep.subr.bf16.mxu0 0
    %951 = vmatpush1.bf16.msra.mxu0 0
    %952 = vmatprep.subr.bf16.mxu0 0
    %953 = vmatpush1.bf16.msra.mxu0 0
    %954 = vmatprep.subr.bf16.mxu0 0
    %955 = vmatpush1.bf16.msra.mxu0 0
    %956 = vmatprep.subr.bf16.mxu0 0
    %957 = vmatpush1.bf16.msra.mxu0 0
    %958 = vmatprep.subr.bf16.mxu0 0
    %959 = vmatpush1.bf16.msra.mxu0 0
    %960 = vmatprep.subr.bf16.mxu0 0
    %961 = vmatpush1.bf16.msra.mxu0 %v209
    %962 = vmatprep.subr.bf16.mxu0 0
    %963 = vmatpush1.bf16.msra.mxu0 %v208
    %964 = vmatprep.subr.bf16.mxu0 0
    %965 = vmatpush2.bf16.msra.mxu0 0
    %966 = vmatprep.subr.bf16.mxu0 0
    %967 = vmatpush2.bf16.msra.mxu0 0
    %968 = vmatprep.subr.bf16.mxu0 0
    %969 = vmatpush2.bf16.msra.mxu0 0
    %970 = vmatprep.subr.bf16.mxu0 0
    %971 = vmatpush2.bf16.msra.mxu0 0
    %972 = vmatprep.subr.bf16.mxu0 0
    %973 = vmatpush2.bf16.msra.mxu0 0
    %974 = vmatprep.subr.bf16.mxu0 0
    %975 = vmatpush2.bf16.msra.mxu0 0
    %976 = vmatprep.subr.bf16.mxu0 0
    %977 = vmatpush2.bf16.msra.mxu0 0
    %978 = vmatprep.subr.bf16.mxu0 0
    %979 = vmatpush2.bf16.msra.mxu0 0
    %980 = vmatprep.mubr.bf16.mxu0 0
    %981 = vmatmul.mubr.bf16.gmra.mxu0 %v946
    %v982 = vpop.f32.mrf.mxu0
    %v983 = vadd.f32 %v940, %v982
    %v984 = vpop.f32.mrf.mxu0
    %v985 = vpop.f32.mrf.mxu0
    %v986 = vpop.f32.mrf.mxu0
    %987 = vdwg.mxu0
    %v988 = vadd.f32 %v983, %v260
    %989 = vst [vmem:[#allocation11] sm:$0xff] %v988
    %v990 = vadd.f32 %v988, %v268
    %991 = vmax.xlane.f32.xlu0 %v990
    %v992 = vpop.xlane.xlu0 %991
    %v993 = vsub.f32 %v990, %v992
    %v994 = vmul.f32 %v993, 1.442695
    %v995 = vpow.pop %v994
    %996 = vadd.xlane.f32.xlu0 %v995
    %v997 = vpop.xlane.xlu0 %996
    %v998 = vlog2.pop %v997
    %v999 = vmul.f32 %v998, 0.6931472
    %v1000 = vadd.f32 %v992, %v999
    %v1001 = vsub.f32 %v988, %v1000
    %s1002 = scalar_lea.vmem [#allocation10], 56
    %1003 = vst [vmem:[%s1002] sm:$0xff] %v1001
    // Predicated region
    $region46: #{tpu_custom_call.1} parent=1 // pred_check
      _
    $region47: #{tpu_custom_call.1} parent=1 // pred_check_branch
      %1005 = sbr.rel (0) target = $region49
    $region48: #{tpu_custom_call.1} parent=1 // pred_region
      %s1007 = ssub.s32 1024, 1024
      %1008 = vsyncadd [#allocation4], %s1007
      %s1009 = sshll.u32 [#allocation10], 4
      %s1010 = int_to_ptr.vmem [resolvable:$true] %s1009
      %1015 = dma.vmem_to_hbm [thread:$0]  %s1010, 1024, %s6, [#allocation4], 128, 128, 8
    $region49: #{tpu_custom_call.1} parent=1 // pred_fallthru
      _
    // Predicated region
    $region50: #{tpu_custom_call.1} parent=1 // pred_check
      _
    $region51: #{tpu_custom_call.1} parent=1 // pred_check_branch
      %1017 = sbr.rel (0) target = $region53
    $region52: #{tpu_custom_call.1} parent=1 // pred_region
      %s1019 = ssub.s32 128, 128
      %1020 = vsyncadd [#allocation12], %s1019
      %s1022 = sshll.u32 [#allocation11], 4
      %s1023 = int_to_ptr.vmem [resolvable:$true] %s1022
      %1025 = dma.vmem_to_hbm [thread:$0]  %s1023, 128, %s7, [#allocation12]
    $region53: #{tpu_custom_call.1} parent=1 // pred_fallthru
      _
    // Predicated region
    $region54: #{tpu_custom_call.1} parent=1 // pred_check
      _
    $region55: #{tpu_custom_call.1} parent=1 // pred_check_branch
      %1027 = sbr.rel (0) target = $region57
    $region56: #{tpu_custom_call.1} parent=1 // pred_region
      %1028 = dma.done [#allocation4], 1024
    $region57: #{tpu_custom_call.1} parent=1 // pred_fallthru
      _
    // Predicated region
    $region58: #{tpu_custom_call.1} parent=1 // pred_check
      _
    $region59: #{tpu_custom_call.1} parent=1 // pred_check_branch
      %1030 = sbr.rel (0) target = $region61
    $region60: #{tpu_custom_call.1} parent=1 // pred_region
      %1031 = dma.done [#allocation12], 128
    $region61: #{tpu_custom_call.1} parent=1 // pred_fallthru
      _
    %1032 = vsyncpa [#allocation3], 1
    %1033 = vsyncpa [#allocation6], 1
    %1034 = vsyncpa [#allocation9], 1
    %1035 = vsyncpa [#allocation4], 1
    %1036 = vsyncpa [#allocation12], 1

</llo_original>
